<compile_context>
chip_gen: v6e
topology: v6e:2x2x1
jax: 0.10.0
libtpu: 0.0.40
codegen_flags: <defaults>
</compile_context>

<pallas_src>
import jax
import jax.numpy as jnp
from jax import lax
from jax.experimental import pallas as pl
from jax.experimental.pallas import tpu as pltpu

EPS = 1e-5


def _mxu_dtype():
    """bf16 MXU operands on every TPU generation (v5e MXU is bf16-native too);
    f32 on non-TPU backends."""
    try:
        kind = jax.devices()[0].device_kind.lower()
    except Exception:
        return jnp.float32
    if "tpu" in kind or "v5" in kind or "v6" in kind or "v7" in kind:
        return jnp.bfloat16
    return jnp.float32


def _vmem_ceiling_bytes():
    """Generation-aware VMEM ceiling: ~7/8 of physical capacity
    (~56 MiB usable on v7x, ~112 MiB on v5e/v6e)."""
    try:
        cap = int(pltpu.get_tpu_info().vmem_capacity_bytes)
    except Exception:
        cap = 64 << 20          # conservative (v7x-sized) fallback
    return max(cap - max(cap // 8, 8 << 20), 16 << 20)


def _elu(x):
    # ELU(alpha=1); the min() keeps the unselected exp branch finite.
    return jnp.where(x > 0, x, jnp.exp(jnp.minimum(x, 0.0)) - 1.0)


def _make_kernel(N, H, W, C, mxu_dtype):
    WC = W * C
    NH = N * H
    inv_count = 1.0 / float(N * H * W)

    def kernel(x_ref, w1r_ref, t2_ref, t3_ref, bn_ref, out_ref):
        bn = bn_ref[...]                                    # (8, WC) f32 params

        # Per-image vertical-boundary masks (shared by both 3x3 convs).
        # 3-D iota along the H axis avoids an integer modulo in the kernel.
        h_id = lax.broadcasted_iota(jnp.int32, (N, H, WC), 1).reshape(NH, WC)
        top_keep = h_id != 0
        bot_keep = h_id != (H - 1)

        def bn_fold(y, g, b):
            # Training-mode BatchNorm2d on a lane-dense (rows, W*C) slab.
            # One reduction pass; the per-channel reduce+broadcast over the W
            # pixel positions packed into the lane axis is log2(W) cyclic lane
            # rolls (XLU) instead of a pooling matmul. Variance is clamped to
            # guard against E[x^2]-E[x]^2 cancellation going negative.
            s = jnp.sum(y, axis=0, keepdims=True)           # (1, WC)
            ss = jnp.sum(y * y, axis=0, keepdims=True)      # (1, WC)
            step = C
            while step < WC:
                s = s + pltpu.roll(s, shift=step, axis=1)
                ss = ss + pltpu.roll(ss, shift=step, axis=1)
                step *= 2
            mean = s * inv_count
            var = jnp.maximum(ss * inv_count - mean * mean, 0.0)
            scale = g * lax.rsqrt(var + EPS)
            return y * scale + (b - mean * scale)

        # ---- fused 1x1 convs: conv1 (lanes [:WC]) | residual (lanes [WC:]) ----
        x_m = x_ref[...].astype(mxu_dtype)                  # cast in-kernel
        y1r = jnp.dot(x_m, w1r_ref[...],
                      preferred_element_type=jnp.float32)   # (NH, 2*WC)
        y1 = _elu(bn_fold(y1r[:, :WC], bn[0:1], bn[1:2]))
        res = _elu(bn_fold(y1r[:, WC:], bn[6:7], bn[7:8]))

        def conv3x3(y_in, t_ref):
            # +/-1-row operands via in-register sublane rolls + boundary mask;
            # single K=3*WC matmul (taps stacked along K in the weight).
            up = jnp.where(top_keep, pltpu.roll(y_in, shift=1, axis=0), 0.0)
            dn = jnp.where(bot_keep, pltpu.roll(y_in, shift=NH - 1, axis=0), 0.0)
            lhs = jnp.concatenate([up, y_in, dn], axis=1).astype(mxu_dtype)
            return jnp.dot(lhs, t_ref[...],
                           preferred_element_type=jnp.float32)   # (NH, WC)

        y2 = _elu(bn_fold(conv3x3(y1, t2_ref), bn[2:3], bn[3:4]))
        y3 = bn_fold(conv3x3(y2, t3_ref), bn[4:5], bn[5:6])

        # ---- final ELU(out + res), lane-dense (NH, WC) store ----
        out_ref[...] = _elu(y3 + res)

    return kernel


def block1_forward(x, p, mxu_dtype=None):
    N, H, W, Cin = x.shape
    C = p["w1"].shape[1]
    WC = W * C
    NH = N * H
    assert W > 0 and (W & (W - 1)) == 0, \
        "roll-based BN pooling assumes power-of-two W"
    if mxu_dtype is None:
        mxu_dtype = _mxu_dtype()
    f32 = jnp.float32

    # -------- trace-time weight / layout prep (outside the kernel) --------
    # Input stays f32: the bf16 cast happens inside the kernel (no extra HBM
    # round trip from a wrapper-side cast at production sizes).
    x2d = x.reshape(NH, W * Cin).astype(f32)

    eye_w = jnp.eye(W, dtype=f32)
    # conv1 and residual 1x1 convs fused into one block-diagonal weight
    w1r = jnp.concatenate([jnp.kron(eye_w, p["w1"].astype(f32)),
                           jnp.kron(eye_w, p["wr"].astype(f32))],
                          axis=1).astype(mxu_dtype)          # (W*Cin, 2*WC)

    def banded(w_hwio):
        # 3x3 'same' conv -> one (3*WC, WC) block-Toeplitz weight: the three
        # vertical taps are stacked along K; horizontal taps + zero padding
        # live in the band structure.
        mats = []
        for ky in range(3):
            t = jnp.zeros((WC, WC), f32)
            for kx in range(3):
                t = t + jnp.kron(jnp.eye(W, k=-(kx - 1), dtype=f32),
                                 w_hwio[ky, kx].astype(f32))
            mats.append(t)
        return jnp.concatenate(mats, axis=0).astype(mxu_dtype)   # (3*WC, WC)

    t2 = banded(p["w2"])
    t3 = banded(p["w3"])

    def lanes(v):        # (1, C) BN param -> lane-tiled (1, WC)
        return jnp.tile(v.reshape(1, C).astype(f32), (1, W))

    # All 8 BN affine params packed into a single (8, WC) input.
    # NOTE: conv biases b1/b2/b3/br are intentionally NOT passed to the
    # kernel: a pre-BN per-channel bias is an exact no-op under training-mode
    # BatchNorm (the batch mean removes it).
    bn_pack = jnp.concatenate(
        [lanes(p["g1"]), lanes(p["be1"]),
         lanes(p["g2"]), lanes(p["be2"]),
         lanes(p["g3"]), lanes(p["be3"]),
         lanes(p["gr"]), lanes(p["ber"])], axis=0)           # (8, WC)

    args = (x2d, w1r, t2, t3, bn_pack)

    footprint = (sum(int(a.size) * a.dtype.itemsize for a in args)
                 + NH * WC * 4)                              # + output
    vmem_limit = int(min(max(8 * footprint, 16 << 20), _vmem_ceiling_bytes()))

    flops = (2 * NH * (W * Cin) * (2 * WC)        # fused 1x1 convs
             + 2 * 2 * NH * (3 * WC) * WC         # two K=3*WC 3x3-conv matmuls
             + 24 * NH * WC)                      # BN apply / ELU / adds
    cost = pl.CostEstimate(flops=flops,
                           transcendentals=5 * NH * WC,
                           bytes_accessed=int(footprint))

    out2d = pl.pallas_call(
        _make_kernel(N, H, W, C, mxu_dtype),
        out_shape=jax.ShapeDtypeStruct((NH, WC), jnp.float32),   # lane-dense out
        in_specs=[pl.BlockSpec(memory_space=pltpu.MemorySpace.VMEM)] * len(args),
        out_specs=pl.BlockSpec(memory_space=pltpu.MemorySpace.VMEM),
        compiler_params=pltpu.CompilerParams(vmem_limit_bytes=vmem_limit),
        cost_estimate=cost,
    )(*args)
    return out2d.reshape(N, H, W, C)


# ---------------- pure-JAX reference (module semantics, f32) ----------------
def _conv_ref(x, w_hwio, b):
    y = lax.conv_general_dilated(x, w_hwio, (1, 1), "SAME",
                                 dimension_numbers=("NHWC", "HWIO", "NHWC"))
    return y + b.reshape(1, 1, 1, -1)


def _bn_ref(y, g, b):
    mean = jnp.mean(y, axis=(0, 1, 2), keepdims=True)
    var = jnp.mean((y - mean) ** 2, axis=(0, 1, 2), keepdims=True)
    return (y - mean) / jnp.sqrt(var + EPS) * g.reshape(1, 1, 1, -1) \
        + b.reshape(1, 1, 1, -1)


def block1_ref(x, p):
    C = p["w1"].shape[1]
    y1 = _elu(_bn_ref(_conv_ref(x, p["w1"].reshape(1, 1, -1, C), p["b1"]),
                      p["g1"], p["be1"]))
    y2 = _elu(_bn_ref(_conv_ref(y1, p["w2"], p["b2"]), p["g2"], p["be2"]))
    y3 = _bn_ref(_conv_ref(y2, p["w3"], p["b3"]), p["g3"], p["be3"])
    res = _elu(_bn_ref(_conv_ref(x, p["wr"].reshape(1, 1, -1, C), p["br"]),
                       p["gr"], p["ber"]))
    return _elu(y3 + res)


def init_params(key, in_channels, out_channels):
    C = out_channels // 4
    ks = jax.random.split(key, 16)
    f32 = jnp.float32

    def bn(k1, k2):
        return (1.0 + 0.1 * jax.random.normal(k1, (1, C), f32),
                0.1 * jax.random.normal(k2, (1, C), f32))

    g1, be1 = bn(ks[2], ks[3])
    g2, be2 = bn(ks[6], ks[7])
    g3, be3 = bn(ks[10], ks[11])
    gr, ber = bn(ks[14], ks[15])
    return {
        "w1": 0.3 * jax.random.normal(ks[0], (in_channels, C), f32),
        "b1": 0.1 * jax.random.normal(ks[1], (1, C), f32),
        "g1": g1, "be1": be1,
        "w2": 0.3 * jax.random.normal(ks[4], (3, 3, C, C), f32),
        "b2": 0.1 * jax.random.normal(ks[5], (1, C), f32),
        "g2": g2, "be2": be2,
        "w3": 0.3 * jax.random.normal(ks[8], (3, 3, C, C), f32),
        "b3": 0.1 * jax.random.normal(ks[9], (1, C), f32),
        "g3": g3, "be3": be3,
        "wr": 0.3 * jax.random.normal(ks[12], (in_channels, C), f32),
        "br": 0.1 * jax.random.normal(ks[13], (1, C), f32),
        "gr": gr, "ber": ber,
    }


if __name__ == "__main__":
    key = jax.random.PRNGKey(0)
    kx, kp = jax.random.split(key)

    N, H, W = 2, 16, 16
    in_channels, out_channels = 4, 32   # C = out_channels // 4 = 8

    # NHWC input (== NCHW [2, 4, 16, 16] in the PyTorch module convention)
    x = jax.random.normal(kx, (N, H, W, in_channels), jnp.float32)
    params = init_params(kp, in_channels, out_channels)

    mxu = _mxu_dtype()
    out = jax.block_until_ready(block1_forward(x, params, mxu_dtype=mxu))
    ref = jax.block_until_ready(block1_ref(x, params))

    assert out.shape == (N, H, W, out_channels // 4), out.shape
    max_diff = float(jnp.max(jnp.abs(out - ref)))
    tol = 2e-1 if mxu == jnp.bfloat16 else 2e-3
    assert max_diff < tol, f"max diff vs reference = {max_diff} (tol {tol})"

    print("KERNEL_OK")
</pallas_src>

<mosaic_0001>
module attributes {stable_mosaic.version = 11 : i64} {
  func.func @kernel(%arg0: memref<32x64xf32, #tpu.memory_space<vmem>>, %arg1: memref<64x256xf32, #tpu.memory_space<vmem>>, %arg2: memref<384x128xf32, #tpu.memory_space<vmem>>, %arg3: memref<384x128xf32, #tpu.memory_space<vmem>>, %arg4: memref<8x128xf32, #tpu.memory_space<vmem>>, %arg5: memref<32x128xf32, #tpu.memory_space<vmem>>) attributes {dimension_semantics = [], scalar_prefetch = 0 : i64, scratch_operands = 0 : i64, tpu.core_type = #tpu.core_type<tc>} {
    %c0 = arith.constant 0 : index
    %c0_0 = arith.constant 0 : index
    %0 = vector.load %arg4[%c0, %c0_0] : memref<8x128xf32, #tpu.memory_space<vmem>>, vector<8x128xf32>
    %1 = tpu.iota {dimensions = array<i32: 1>} : vector<2x16x128xi32>
    %2 = vector.shape_cast %1 : vector<2x16x128xi32> to vector<32x128xi32>
    %c0_i32 = arith.constant 0 : i32
    %3 = vector.broadcast %c0_i32 : i32 to vector<32x128xi32>
    %4 = arith.cmpi ne, %2, %3 : vector<32x128xi32>
    %c15_i32 = arith.constant 15 : i32
    %5 = vector.broadcast %c15_i32 : i32 to vector<32x128xi32>
    %6 = arith.cmpi ne, %2, %5 : vector<32x128xi32>
    %c0_1 = arith.constant 0 : index
    %c0_2 = arith.constant 0 : index
    %7 = vector.load %arg0[%c0_1, %c0_2] : memref<32x64xf32, #tpu.memory_space<vmem>>, vector<32x64xf32>
    %c0_3 = arith.constant 0 : index
    %c0_4 = arith.constant 0 : index
    %8 = vector.load %arg1[%c0_3, %c0_4] : memref<64x256xf32, #tpu.memory_space<vmem>>, vector<64x256xf32>
    %cst = arith.constant dense<0.000000e+00> : vector<32x256xf32>
    %9 = tpu.matmul %7, %8, %cst {dimension_numbers = #tpu.dot_dimension_numbers<[1], [0], [0], [1], [0, 0, 1, 1], [], []>} : vector<32x64xf32>, vector<64x256xf32>, vector<32x256xf32> -> vector<32x256xf32>
    %10 = vector.extract_strided_slice %9 {offsets = [0, 0], sizes = [32, 128], strides = [1, 1]} : vector<32x256xf32> to vector<32x128xf32>
    %11 = vector.extract_strided_slice %0 {offsets = [0, 0], sizes = [1, 128], strides = [1, 1]} : vector<8x128xf32> to vector<1x128xf32>
    %12 = vector.extract_strided_slice %0 {offsets = [1, 0], sizes = [1, 128], strides = [1, 1]} : vector<8x128xf32> to vector<1x128xf32>
    %cst_5 = arith.constant dense<0.000000e+00> : vector<128xf32>
    %13 = vector.multi_reduction <add>, %10, %cst_5 [0] : vector<32x128xf32> to vector<128xf32>
    %14 = vector.shape_cast %13 : vector<128xf32> to vector<1x128xf32>
    %15 = arith.mulf %10, %10 : vector<32x128xf32>
    %cst_6 = arith.constant dense<0.000000e+00> : vector<128xf32>
    %16 = vector.multi_reduction <add>, %15, %cst_6 [0] : vector<32x128xf32> to vector<128xf32>
    %17 = vector.shape_cast %16 : vector<128xf32> to vector<1x128xf32>
    %c8_i32 = arith.constant 8 : i32
    %18 = tpu.dynamic_rotate %14 by %c8_i32 dim 1 : vector<1x128xf32>, i32 -> vector<1x128xf32>
    %19 = arith.addf %14, %18 : vector<1x128xf32>
    %c8_i32_7 = arith.constant 8 : i32
    %20 = tpu.dynamic_rotate %17 by %c8_i32_7 dim 1 : vector<1x128xf32>, i32 -> vector<1x128xf32>
    %21 = arith.addf %17, %20 : vector<1x128xf32>
    %c16_i32 = arith.constant 16 : i32
    %22 = tpu.dynamic_rotate %19 by %c16_i32 dim 1 : vector<1x128xf32>, i32 -> vector<1x128xf32>
    %23 = arith.addf %19, %22 : vector<1x128xf32>
    %c16_i32_8 = arith.constant 16 : i32
    %24 = tpu.dynamic_rotate %21 by %c16_i32_8 dim 1 : vector<1x128xf32>, i32 -> vector<1x128xf32>
    %25 = arith.addf %21, %24 : vector<1x128xf32>
    %c32_i32 = arith.constant 32 : i32
    %26 = tpu.dynamic_rotate %23 by %c32_i32 dim 1 : vector<1x128xf32>, i32 -> vector<1x128xf32>
    %27 = arith.addf %23, %26 : vector<1x128xf32>
    %c32_i32_9 = arith.constant 32 : i32
    %28 = tpu.dynamic_rotate %25 by %c32_i32_9 dim 1 : vector<1x128xf32>, i32 -> vector<1x128xf32>
    %29 = arith.addf %25, %28 : vector<1x128xf32>
    %c64_i32 = arith.constant 64 : i32
    %30 = tpu.dynamic_rotate %27 by %c64_i32 dim 1 : vector<1x128xf32>, i32 -> vector<1x128xf32>
    %31 = arith.addf %27, %30 : vector<1x128xf32>
    %c64_i32_10 = arith.constant 64 : i32
    %32 = tpu.dynamic_rotate %29 by %c64_i32_10 dim 1 : vector<1x128xf32>, i32 -> vector<1x128xf32>
    %33 = arith.addf %29, %32 : vector<1x128xf32>
    %cst_11 = arith.constant 0.001953125 : f32
    %34 = vector.broadcast %cst_11 : f32 to vector<1x128xf32>
    %35 = arith.mulf %31, %34 : vector<1x128xf32>
    %cst_12 = arith.constant 0.001953125 : f32
    %36 = vector.broadcast %cst_12 : f32 to vector<1x128xf32>
    %37 = arith.mulf %33, %36 : vector<1x128xf32>
    %38 = arith.mulf %35, %35 : vector<1x128xf32>
    %39 = arith.subf %37, %38 : vector<1x128xf32>
    %cst_13 = arith.constant 0.000000e+00 : f32
    %40 = vector.broadcast %cst_13 : f32 to vector<1x128xf32>
    %41 = arith.maximumf %39, %40 : vector<1x128xf32>
    %cst_14 = arith.constant 9.99999974E-6 : f32
    %42 = vector.broadcast %cst_14 : f32 to vector<1x128xf32>
    %43 = arith.addf %41, %42 : vector<1x128xf32>
    %44 = math.rsqrt %43 : vector<1x128xf32>
    %45 = arith.mulf %11, %44 : vector<1x128xf32>
    %46 = vector.broadcast %45 : vector<1x128xf32> to vector<32x128xf32>
    %47 = arith.mulf %10, %46 : vector<32x128xf32>
    %48 = arith.mulf %35, %45 : vector<1x128xf32>
    %49 = arith.subf %12, %48 : vector<1x128xf32>
    %50 = vector.broadcast %49 : vector<1x128xf32> to vector<32x128xf32>
    %51 = arith.addf %47, %50 : vector<32x128xf32>
    %cst_15 = arith.constant 0.000000e+00 : f32
    %52 = vector.broadcast %cst_15 : f32 to vector<32x128xf32>
    %53 = arith.cmpf ogt, %51, %52 : vector<32x128xf32>
    %cst_16 = arith.constant 0.000000e+00 : f32
    %54 = vector.broadcast %cst_16 : f32 to vector<32x128xf32>
    %55 = arith.minimumf %51, %54 : vector<32x128xf32>
    %56 = math.exp %55 : vector<32x128xf32>
    %cst_17 = arith.constant 1.000000e+00 : f32
    %57 = vector.broadcast %cst_17 : f32 to vector<32x128xf32>
    %58 = arith.subf %56, %57 : vector<32x128xf32>
    %59 = arith.select %53, %51, %58 : vector<32x128xi1>, vector<32x128xf32>
    %60 = vector.extract_strided_slice %9 {offsets = [0, 128], sizes = [32, 128], strides = [1, 1]} : vector<32x256xf32> to vector<32x128xf32>
    %61 = vector.extract_strided_slice %0 {offsets = [6, 0], sizes = [1, 128], strides = [1, 1]} : vector<8x128xf32> to vector<1x128xf32>
    %62 = vector.extract_strided_slice %0 {offsets = [7, 0], sizes = [1, 128], strides = [1, 1]} : vector<8x128xf32> to vector<1x128xf32>
    %cst_18 = arith.constant dense<0.000000e+00> : vector<128xf32>
    %63 = vector.multi_reduction <add>, %60, %cst_18 [0] : vector<32x128xf32> to vector<128xf32>
    %64 = vector.shape_cast %63 : vector<128xf32> to vector<1x128xf32>
    %65 = arith.mulf %60, %60 : vector<32x128xf32>
    %cst_19 = arith.constant dense<0.000000e+00> : vector<128xf32>
    %66 = vector.multi_reduction <add>, %65, %cst_19 [0] : vector<32x128xf32> to vector<128xf32>
    %67 = vector.shape_cast %66 : vector<128xf32> to vector<1x128xf32>
    %c8_i32_20 = arith.constant 8 : i32
    %68 = tpu.dynamic_rotate %64 by %c8_i32_20 dim 1 : vector<1x128xf32>, i32 -> vector<1x128xf32>
    %69 = arith.addf %64, %68 : vector<1x128xf32>
    %c8_i32_21 = arith.constant 8 : i32
    %70 = tpu.dynamic_rotate %67 by %c8_i32_21 dim 1 : vector<1x128xf32>, i32 -> vector<1x128xf32>
    %71 = arith.addf %67, %70 : vector<1x128xf32>
    %c16_i32_22 = arith.constant 16 : i32
    %72 = tpu.dynamic_rotate %69 by %c16_i32_22 dim 1 : vector<1x128xf32>, i32 -> vector<1x128xf32>
    %73 = arith.addf %69, %72 : vector<1x128xf32>
    %c16_i32_23 = arith.constant 16 : i32
    %74 = tpu.dynamic_rotate %71 by %c16_i32_23 dim 1 : vector<1x128xf32>, i32 -> vector<1x128xf32>
    %75 = arith.addf %71, %74 : vector<1x128xf32>
    %c32_i32_24 = arith.constant 32 : i32
    %76 = tpu.dynamic_rotate %73 by %c32_i32_24 dim 1 : vector<1x128xf32>, i32 -> vector<1x128xf32>
    %77 = arith.addf %73, %76 : vector<1x128xf32>
    %c32_i32_25 = arith.constant 32 : i32
    %78 = tpu.dynamic_rotate %75 by %c32_i32_25 dim 1 : vector<1x128xf32>, i32 -> vector<1x128xf32>
    %79 = arith.addf %75, %78 : vector<1x128xf32>
    %c64_i32_26 = arith.constant 64 : i32
    %80 = tpu.dynamic_rotate %77 by %c64_i32_26 dim 1 : vector<1x128xf32>, i32 -> vector<1x128xf32>
    %81 = arith.addf %77, %80 : vector<1x128xf32>
    %c64_i32_27 = arith.constant 64 : i32
    %82 = tpu.dynamic_rotate %79 by %c64_i32_27 dim 1 : vector<1x128xf32>, i32 -> vector<1x128xf32>
    %83 = arith.addf %79, %82 : vector<1x128xf32>
    %cst_28 = arith.constant 0.001953125 : f32
    %84 = vector.broadcast %cst_28 : f32 to vector<1x128xf32>
    %85 = arith.mulf %81, %84 : vector<1x128xf32>
    %cst_29 = arith.constant 0.001953125 : f32
    %86 = vector.broadcast %cst_29 : f32 to vector<1x128xf32>
    %87 = arith.mulf %83, %86 : vector<1x128xf32>
    %88 = arith.mulf %85, %85 : vector<1x128xf32>
    %89 = arith.subf %87, %88 : vector<1x128xf32>
    %cst_30 = arith.constant 0.000000e+00 : f32
    %90 = vector.broadcast %cst_30 : f32 to vector<1x128xf32>
    %91 = arith.maximumf %89, %90 : vector<1x128xf32>
    %cst_31 = arith.constant 9.99999974E-6 : f32
    %92 = vector.broadcast %cst_31 : f32 to vector<1x128xf32>
    %93 = arith.addf %91, %92 : vector<1x128xf32>
    %94 = math.rsqrt %93 : vector<1x128xf32>
    %95 = arith.mulf %61, %94 : vector<1x128xf32>
    %96 = vector.broadcast %95 : vector<1x128xf32> to vector<32x128xf32>
    %97 = arith.mulf %60, %96 : vector<32x128xf32>
    %98 = arith.mulf %85, %95 : vector<1x128xf32>
    %99 = arith.subf %62, %98 : vector<1x128xf32>
    %100 = vector.broadcast %99 : vector<1x128xf32> to vector<32x128xf32>
    %101 = arith.addf %97, %100 : vector<32x128xf32>
    %cst_32 = arith.constant 0.000000e+00 : f32
    %102 = vector.broadcast %cst_32 : f32 to vector<32x128xf32>
    %103 = arith.cmpf ogt, %101, %102 : vector<32x128xf32>
    %cst_33 = arith.constant 0.000000e+00 : f32
    %104 = vector.broadcast %cst_33 : f32 to vector<32x128xf32>
    %105 = arith.minimumf %101, %104 : vector<32x128xf32>
    %106 = math.exp %105 : vector<32x128xf32>
    %cst_34 = arith.constant 1.000000e+00 : f32
    %107 = vector.broadcast %cst_34 : f32 to vector<32x128xf32>
    %108 = arith.subf %106, %107 : vector<32x128xf32>
    %109 = arith.select %103, %101, %108 : vector<32x128xi1>, vector<32x128xf32>
    %c1_i32 = arith.constant 1 : i32
    %110 = tpu.dynamic_rotate %59 by %c1_i32 dim 0 : vector<32x128xf32>, i32 -> vector<32x128xf32>
    %cst_35 = arith.constant 0.000000e+00 : f32
    %111 = vector.broadcast %cst_35 : f32 to vector<32x128xf32>
    %112 = arith.select %4, %110, %111 : vector<32x128xi1>, vector<32x128xf32>
    %c31_i32 = arith.constant 31 : i32
    %113 = tpu.dynamic_rotate %59 by %c31_i32 dim 0 : vector<32x128xf32>, i32 -> vector<32x128xf32>
    %cst_36 = arith.constant 0.000000e+00 : f32
    %114 = vector.broadcast %cst_36 : f32 to vector<32x128xf32>
    %115 = arith.select %6, %113, %114 : vector<32x128xi1>, vector<32x128xf32>
    %116 = tpu.concatenate %112, %59, %115 in 1 : vector<32x128xf32>, vector<32x128xf32>, vector<32x128xf32> -> vector<32x384xf32>
    %c0_37 = arith.constant 0 : index
    %c0_38 = arith.constant 0 : index
    %117 = vector.load %arg2[%c0_37, %c0_38] : memref<384x128xf32, #tpu.memory_space<vmem>>, vector<384x128xf32>
    %cst_39 = arith.constant dense<0.000000e+00> : vector<32x128xf32>
    %118 = tpu.matmul %116, %117, %cst_39 {dimension_numbers = #tpu.dot_dimension_numbers<[1], [0], [0], [1], [0, 0, 1, 1], [], []>} : vector<32x384xf32>, vector<384x128xf32>, vector<32x128xf32> -> vector<32x128xf32>
    %119 = vector.extract_strided_slice %0 {offsets = [2, 0], sizes = [1, 128], strides = [1, 1]} : vector<8x128xf32> to vector<1x128xf32>
    %120 = vector.extract_strided_slice %0 {offsets = [3, 0], sizes = [1, 128], strides = [1, 1]} : vector<8x128xf32> to vector<1x128xf32>
    %cst_40 = arith.constant dense<0.000000e+00> : vector<128xf32>
    %121 = vector.multi_reduction <add>, %118, %cst_40 [0] : vector<32x128xf32> to vector<128xf32>
    %122 = vector.shape_cast %121 : vector<128xf32> to vector<1x128xf32>
    %123 = arith.mulf %118, %118 : vector<32x128xf32>
    %cst_41 = arith.constant dense<0.000000e+00> : vector<128xf32>
    %124 = vector.multi_reduction <add>, %123, %cst_41 [0] : vector<32x128xf32> to vector<128xf32>
    %125 = vector.shape_cast %124 : vector<128xf32> to vector<1x128xf32>
    %c8_i32_42 = arith.constant 8 : i32
    %126 = tpu.dynamic_rotate %122 by %c8_i32_42 dim 1 : vector<1x128xf32>, i32 -> vector<1x128xf32>
    %127 = arith.addf %122, %126 : vector<1x128xf32>
    %c8_i32_43 = arith.constant 8 : i32
    %128 = tpu.dynamic_rotate %125 by %c8_i32_43 dim 1 : vector<1x128xf32>, i32 -> vector<1x128xf32>
    %129 = arith.addf %125, %128 : vector<1x128xf32>
    %c16_i32_44 = arith.constant 16 : i32
    %130 = tpu.dynamic_rotate %127 by %c16_i32_44 dim 1 : vector<1x128xf32>, i32 -> vector<1x128xf32>
    %131 = arith.addf %127, %130 : vector<1x128xf32>
    %c16_i32_45 = arith.constant 16 : i32
    %132 = tpu.dynamic_rotate %129 by %c16_i32_45 dim 1 : vector<1x128xf32>, i32 -> vector<1x128xf32>
    %133 = arith.addf %129, %132 : vector<1x128xf32>
    %c32_i32_46 = arith.constant 32 : i32
    %134 = tpu.dynamic_rotate %131 by %c32_i32_46 dim 1 : vector<1x128xf32>, i32 -> vector<1x128xf32>
    %135 = arith.addf %131, %134 : vector<1x128xf32>
    %c32_i32_47 = arith.constant 32 : i32
    %136 = tpu.dynamic_rotate %133 by %c32_i32_47 dim 1 : vector<1x128xf32>, i32 -> vector<1x128xf32>
    %137 = arith.addf %133, %136 : vector<1x128xf32>
    %c64_i32_48 = arith.constant 64 : i32
    %138 = tpu.dynamic_rotate %135 by %c64_i32_48 dim 1 : vector<1x128xf32>, i32 -> vector<1x128xf32>
    %139 = arith.addf %135, %138 : vector<1x128xf32>
    %c64_i32_49 = arith.constant 64 : i32
    %140 = tpu.dynamic_rotate %137 by %c64_i32_49 dim 1 : vector<1x128xf32>, i32 -> vector<1x128xf32>
    %141 = arith.addf %137, %140 : vector<1x128xf32>
    %cst_50 = arith.constant 0.001953125 : f32
    %142 = vector.broadcast %cst_50 : f32 to vector<1x128xf32>
    %143 = arith.mulf %139, %142 : vector<1x128xf32>
    %cst_51 = arith.constant 0.001953125 : f32
    %144 = vector.broadcast %cst_51 : f32 to vector<1x128xf32>
    %145 = arith.mulf %141, %144 : vector<1x128xf32>
    %146 = arith.mulf %143, %143 : vector<1x128xf32>
    %147 = arith.subf %145, %146 : vector<1x128xf32>
    %cst_52 = arith.constant 0.000000e+00 : f32
    %148 = vector.broadcast %cst_52 : f32 to vector<1x128xf32>
    %149 = arith.maximumf %147, %148 : vector<1x128xf32>
    %cst_53 = arith.constant 9.99999974E-6 : f32
    %150 = vector.broadcast %cst_53 : f32 to vector<1x128xf32>
    %151 = arith.addf %149, %150 : vector<1x128xf32>
    %152 = math.rsqrt %151 : vector<1x128xf32>
    %153 = arith.mulf %119, %152 : vector<1x128xf32>
    %154 = vector.broadcast %153 : vector<1x128xf32> to vector<32x128xf32>
    %155 = arith.mulf %118, %154 : vector<32x128xf32>
    %156 = arith.mulf %143, %153 : vector<1x128xf32>
    %157 = arith.subf %120, %156 : vector<1x128xf32>
    %158 = vector.broadcast %157 : vector<1x128xf32> to vector<32x128xf32>
    %159 = arith.addf %155, %158 : vector<32x128xf32>
    %cst_54 = arith.constant 0.000000e+00 : f32
    %160 = vector.broadcast %cst_54 : f32 to vector<32x128xf32>
    %161 = arith.cmpf ogt, %159, %160 : vector<32x128xf32>
    %cst_55 = arith.constant 0.000000e+00 : f32
    %162 = vector.broadcast %cst_55 : f32 to vector<32x128xf32>
    %163 = arith.minimumf %159, %162 : vector<32x128xf32>
    %164 = math.exp %163 : vector<32x128xf32>
    %cst_56 = arith.constant 1.000000e+00 : f32
    %165 = vector.broadcast %cst_56 : f32 to vector<32x128xf32>
    %166 = arith.subf %164, %165 : vector<32x128xf32>
    %167 = arith.select %161, %159, %166 : vector<32x128xi1>, vector<32x128xf32>
    %c1_i32_57 = arith.constant 1 : i32
    %168 = tpu.dynamic_rotate %167 by %c1_i32_57 dim 0 : vector<32x128xf32>, i32 -> vector<32x128xf32>
    %cst_58 = arith.constant 0.000000e+00 : f32
    %169 = vector.broadcast %cst_58 : f32 to vector<32x128xf32>
    %170 = arith.select %4, %168, %169 : vector<32x128xi1>, vector<32x128xf32>
    %c31_i32_59 = arith.constant 31 : i32
    %171 = tpu.dynamic_rotate %167 by %c31_i32_59 dim 0 : vector<32x128xf32>, i32 -> vector<32x128xf32>
    %cst_60 = arith.constant 0.000000e+00 : f32
    %172 = vector.broadcast %cst_60 : f32 to vector<32x128xf32>
    %173 = arith.select %6, %171, %172 : vector<32x128xi1>, vector<32x128xf32>
    %174 = tpu.concatenate %170, %167, %173 in 1 : vector<32x128xf32>, vector<32x128xf32>, vector<32x128xf32> -> vector<32x384xf32>
    %c0_61 = arith.constant 0 : index
    %c0_62 = arith.constant 0 : index
    %175 = vector.load %arg3[%c0_61, %c0_62] : memref<384x128xf32, #tpu.memory_space<vmem>>, vector<384x128xf32>
    %cst_63 = arith.constant dense<0.000000e+00> : vector<32x128xf32>
    %176 = tpu.matmul %174, %175, %cst_63 {dimension_numbers = #tpu.dot_dimension_numbers<[1], [0], [0], [1], [0, 0, 1, 1], [], []>} : vector<32x384xf32>, vector<384x128xf32>, vector<32x128xf32> -> vector<32x128xf32>
    %177 = vector.extract_strided_slice %0 {offsets = [4, 0], sizes = [1, 128], strides = [1, 1]} : vector<8x128xf32> to vector<1x128xf32>
    %178 = vector.extract_strided_slice %0 {offsets = [5, 0], sizes = [1, 128], strides = [1, 1]} : vector<8x128xf32> to vector<1x128xf32>
    %cst_64 = arith.constant dense<0.000000e+00> : vector<128xf32>
    %179 = vector.multi_reduction <add>, %176, %cst_64 [0] : vector<32x128xf32> to vector<128xf32>
    %180 = vector.shape_cast %179 : vector<128xf32> to vector<1x128xf32>
    %181 = arith.mulf %176, %176 : vector<32x128xf32>
    %cst_65 = arith.constant dense<0.000000e+00> : vector<128xf32>
    %182 = vector.multi_reduction <add>, %181, %cst_65 [0] : vector<32x128xf32> to vector<128xf32>
    %183 = vector.shape_cast %182 : vector<128xf32> to vector<1x128xf32>
    %c8_i32_66 = arith.constant 8 : i32
    %184 = tpu.dynamic_rotate %180 by %c8_i32_66 dim 1 : vector<1x128xf32>, i32 -> vector<1x128xf32>
    %185 = arith.addf %180, %184 : vector<1x128xf32>
    %c8_i32_67 = arith.constant 8 : i32
    %186 = tpu.dynamic_rotate %183 by %c8_i32_67 dim 1 : vector<1x128xf32>, i32 -> vector<1x128xf32>
    %187 = arith.addf %183, %186 : vector<1x128xf32>
    %c16_i32_68 = arith.constant 16 : i32
    %188 = tpu.dynamic_rotate %185 by %c16_i32_68 dim 1 : vector<1x128xf32>, i32 -> vector<1x128xf32>
    %189 = arith.addf %185, %188 : vector<1x128xf32>
    %c16_i32_69 = arith.constant 16 : i32
    %190 = tpu.dynamic_rotate %187 by %c16_i32_69 dim 1 : vector<1x128xf32>, i32 -> vector<1x128xf32>
    %191 = arith.addf %187, %190 : vector<1x128xf32>
    %c32_i32_70 = arith.constant 32 : i32
    %192 = tpu.dynamic_rotate %189 by %c32_i32_70 dim 1 : vector<1x128xf32>, i32 -> vector<1x128xf32>
    %193 = arith.addf %189, %192 : vector<1x128xf32>
    %c32_i32_71 = arith.constant 32 : i32
    %194 = tpu.dynamic_rotate %191 by %c32_i32_71 dim 1 : vector<1x128xf32>, i32 -> vector<1x128xf32>
    %195 = arith.addf %191, %194 : vector<1x128xf32>
    %c64_i32_72 = arith.constant 64 : i32
    %196 = tpu.dynamic_rotate %193 by %c64_i32_72 dim 1 : vector<1x128xf32>, i32 -> vector<1x128xf32>
    %197 = arith.addf %193, %196 : vector<1x128xf32>
    %c64_i32_73 = arith.constant 64 : i32
    %198 = tpu.dynamic_rotate %195 by %c64_i32_73 dim 1 : vector<1x128xf32>, i32 -> vector<1x128xf32>
    %199 = arith.addf %195, %198 : vector<1x128xf32>
    %cst_74 = arith.constant 0.001953125 : f32
    %200 = vector.broadcast %cst_74 : f32 to vector<1x128xf32>
    %201 = arith.mulf %197, %200 : vector<1x128xf32>
    %cst_75 = arith.constant 0.001953125 : f32
    %202 = vector.broadcast %cst_75 : f32 to vector<1x128xf32>
    %203 = arith.mulf %199, %202 : vector<1x128xf32>
    %204 = arith.mulf %201, %201 : vector<1x128xf32>
    %205 = arith.subf %203, %204 : vector<1x128xf32>
    %cst_76 = arith.constant 0.000000e+00 : f32
    %206 = vector.broadcast %cst_76 : f32 to vector<1x128xf32>
    %207 = arith.maximumf %205, %206 : vector<1x128xf32>
    %cst_77 = arith.constant 9.99999974E-6 : f32
    %208 = vector.broadcast %cst_77 : f32 to vector<1x128xf32>
    %209 = arith.addf %207, %208 : vector<1x128xf32>
    %210 = math.rsqrt %209 : vector<1x128xf32>
    %211 = arith.mulf %177, %210 : vector<1x128xf32>
    %212 = vector.broadcast %211 : vector<1x128xf32> to vector<32x128xf32>
    %213 = arith.mulf %176, %212 : vector<32x128xf32>
    %214 = arith.mulf %201, %211 : vector<1x128xf32>
    %215 = arith.subf %178, %214 : vector<1x128xf32>
    %216 = vector.broadcast %215 : vector<1x128xf32> to vector<32x128xf32>
    %217 = arith.addf %213, %216 : vector<32x128xf32>
    %218 = arith.addf %217, %109 : vector<32x128xf32>
    %cst_78 = arith.constant 0.000000e+00 : f32
    %219 = vector.broadcast %cst_78 : f32 to vector<32x128xf32>
    %220 = arith.cmpf ogt, %218, %219 : vector<32x128xf32>
    %cst_79 = arith.constant 0.000000e+00 : f32
    %221 = vector.broadcast %cst_79 : f32 to vector<32x128xf32>
    %222 = arith.minimumf %218, %221 : vector<32x128xf32>
    %223 = math.exp %222 : vector<32x128xf32>
    %cst_80 = arith.constant 1.000000e+00 : f32
    %224 = vector.broadcast %cst_80 : f32 to vector<32x128xf32>
    %225 = arith.subf %223, %224 : vector<32x128xf32>
    %226 = arith.select %220, %218, %225 : vector<32x128xi1>, vector<32x128xf32>
    %c0_81 = arith.constant 0 : index
    %c0_82 = arith.constant 0 : index
    %227 = vector.load %arg5[%c0_81, %c0_82] : memref<32x128xf32, #tpu.memory_space<vmem>>, vector<32x128xf32>
    tpu.vector_store %arg5[%c0_81, %c0_82], %226 {strides = array<i32>} : memref<32x128xf32, #tpu.memory_space<vmem>>, vector<32x128xf32>,
    return
  }
}

</mosaic_0001>

<llo_original>
// kernel: tpu_custom_call.1
$region0: #{tpu_custom_call.1}
  #allocation0 [shape = 'u32[]', space=smem, size = 0x4, offset = 0x4, fixed_abs, tag = 'smem constant byte address 0x4 - core index']
  #allocation1 [shape = 'u32[144,128]{1,0:T(1,128)}', space=vmem, size = 0x12000, scoped, tag = 'internal scratch']
  %s0 = inlined_call_operand.hbm [shape: f32[32,64], index: 0, kind: input, shape index: {}]
  %s1 = inlined_call_operand.hbm [shape: f32[64,256], index: 1, kind: input, shape index: {}]
  %s2 = inlined_call_operand.hbm [shape: f32[384,128], index: 2, kind: input, shape index: {}]
  %s3 = inlined_call_operand.hbm [shape: f32[384,128], index: 3, kind: input, shape index: {}]
  %s4 = inlined_call_operand.hbm [shape: f32[8,128], index: 4, kind: input, shape index: {}]
  %s5 = inlined_call_operand.hbm [shape: f32[32,128], index: 5, kind: output, shape index: {}]
  %s6 = sld [smem:[#allocation0]]
  $region50: #{tpu_custom_call.1} parent=0
    _
  %s8 = ssub.s32 1, %s6
  %s9 = scalar_select 0, %s8, %s6
  $region1: #{tpu_custom_call.1} parent=0
    #allocation2 [shape = 'u8[16384]{0}', space=vmem, size = 0x4000, scoped, tag = 'input window, operand 0, single buffered']
    #allocation3 [shape = 's32[1]{0}', space=sflag, size = 0x4, scoped, tag = 'scoped memory for tpu_custom_call.1']
    #allocation4 [shape = 's32[1]{0}', space=sflag, size = 0x4, scoped, tag = 'scoped memory for tpu_custom_call.1']
    #allocation5 [shape = 'u8[65536]{0}', space=vmem, size = 0x10000, scoped, tag = 'input window, operand 1, single buffered']
    #allocation6 [shape = 's32[1]{0}', space=sflag, size = 0x4, scoped, tag = 'scoped memory for tpu_custom_call.1']
    #allocation7 [shape = 'u8[196608]{0}', space=vmem, size = 0x30000, scoped, tag = 'input window, operand 2, single buffered']
    #allocation8 [shape = 'u8[196608]{0}', space=vmem, size = 0x30000, scoped, tag = 'input window, operand 3, single buffered']
    #allocation9 [shape = 's32[1]{0}', space=sflag, size = 0x4, scoped, tag = 'scoped memory for tpu_custom_call.1']
    #allocation10 [shape = 'u8[4096]{0}', space=vmem, size = 0x1000, scoped, tag = 'input window, operand 4, single buffered']
    #allocation11 [shape = 'u8[16384]{0}', space=vmem, size = 0x4000, scoped, tag = 'output window, operand 0, single buffered']
    %10 = vsyncpa [#allocation3], 0
    %11 = vsyncpa [#allocation6], 0
    %12 = vsyncpa [#allocation9], 0
    %13 = vsyncpa [#allocation4], 0
    // Predicated region
    $region2: #{tpu_custom_call.1} parent=1 // pred_check
      _
    $region3: #{tpu_custom_call.1} parent=1 // pred_check_branch
      %15 = sbr.rel (0) target = $region5
    $region4: #{tpu_custom_call.1} parent=1 // pred_region
      %s17 = ssub.s32 512, 512
      %18 = vsyncadd [#allocation3], %s17
      %s19 = sshll.u32 [#allocation2], 4
      %s20 = int_to_ptr.vmem [resolvable:$true] %s19
      %25 = dma.hbm_to_vmem [thread:$0]  %s0, 512, %s20, [#allocation3], 128, 128, 8
    $region5: #{tpu_custom_call.1} parent=1 // pred_fallthru
      _
    // Predicated region
    $region6: #{tpu_custom_call.1} parent=1 // pred_check
      _
    $region7: #{tpu_custom_call.1} parent=1 // pred_check_branch
      %27 = sbr.rel (0) target = $region9
    $region8: #{tpu_custom_call.1} parent=1 // pred_region
      %s29 = ssub.s32 2048, 2048
      %30 = vsyncadd [#allocation6], %s29
      %s31 = sshll.u32 [#allocation5], 4
      %s32 = int_to_ptr.vmem [resolvable:$true] %s31
      %37 = dma.hbm_to_vmem [thread:$0]  %s1, 2048, %s32, [#allocation6], 256, 256, 16
    $region9: #{tpu_custom_call.1} parent=1 // pred_fallthru
      _
    // Predicated region
    $region10: #{tpu_custom_call.1} parent=1 // pred_check
      _
    $region11: #{tpu_custom_call.1} parent=1 // pred_check_branch
      %39 = sbr.rel (0) target = $region13
    $region12: #{tpu_custom_call.1} parent=1 // pred_region
      %s41 = ssub.s32 6144, 6144
      %42 = vsyncadd [#allocation6], %s41
      %s43 = sshll.u32 [#allocation7], 4
      %s44 = int_to_ptr.vmem [resolvable:$true] %s43
      %49 = dma.hbm_to_vmem [thread:$0]  %s2, 6144, %s44, [#allocation6], 128, 128, 8
    $region13: #{tpu_custom_call.1} parent=1 // pred_fallthru
      _
    // Predicated region
    $region14: #{tpu_custom_call.1} parent=1 // pred_check
      _
    $region15: #{tpu_custom_call.1} parent=1 // pred_check_branch
      %51 = sbr.rel (0) target = $region17
    $region16: #{tpu_custom_call.1} parent=1 // pred_region
      %s53 = ssub.s32 6144, 6144
      %54 = vsyncadd [#allocation9], %s53
      %s55 = sshll.u32 [#allocation8], 4
      %s56 = int_to_ptr.vmem [resolvable:$true] %s55
      %61 = dma.hbm_to_vmem [thread:$0]  %s3, 6144, %s56, [#allocation9], 128, 128, 8
    $region17: #{tpu_custom_call.1} parent=1 // pred_fallthru
      _
    // Predicated region
    $region18: #{tpu_custom_call.1} parent=1 // pred_check
      _
    $region19: #{tpu_custom_call.1} parent=1 // pred_check_branch
      %63 = sbr.rel (0) target = $region21
    $region20: #{tpu_custom_call.1} parent=1 // pred_region
      %s65 = ssub.s32 128, 128
      %66 = vsyncadd [#allocation9], %s65
      %s68 = sshll.u32 [#allocation10], 4
      %s69 = int_to_ptr.vmem [resolvable:$true] %s68
      %71 = dma.hbm_to_vmem [thread:$0]  %s4, 128, %s69, [#allocation9]
    $region21: #{tpu_custom_call.1} parent=1 // pred_fallthru
      _
    // Predicated region
    $region22: #{tpu_custom_call.1} parent=1 // pred_check
      _
    $region23: #{tpu_custom_call.1} parent=1 // pred_check_branch
      %73 = sbr.rel (0) target = $region25
    $region24: #{tpu_custom_call.1} parent=1 // pred_region
      %74 = dma.done [#allocation3], 512
    $region25: #{tpu_custom_call.1} parent=1 // pred_fallthru
      _
    // Predicated region
    $region26: #{tpu_custom_call.1} parent=1 // pred_check
      _
    $region27: #{tpu_custom_call.1} parent=1 // pred_check_branch
      %76 = sbr.rel (0) target = $region29
    $region28: #{tpu_custom_call.1} parent=1 // pred_region
      %77 = dma.done [#allocation6], 2048
    $region29: #{tpu_custom_call.1} parent=1 // pred_fallthru
      _
    // Predicated region
    $region30: #{tpu_custom_call.1} parent=1 // pred_check
      _
    $region31: #{tpu_custom_call.1} parent=1 // pred_check_branch
      %79 = sbr.rel (0) target = $region33
    $region32: #{tpu_custom_call.1} parent=1 // pred_region
      %80 = dma.done [#allocation6], 6144
    $region33: #{tpu_custom_call.1} parent=1 // pred_fallthru
      _
    // Predicated region
    $region34: #{tpu_custom_call.1} parent=1 // pred_check
      _
    $region35: #{tpu_custom_call.1} parent=1 // pred_check_branch
      %82 = sbr.rel (0) target = $region37
    $region36: #{tpu_custom_call.1} parent=1 // pred_region
      %83 = dma.done [#allocation9], 6144
    $region37: #{tpu_custom_call.1} parent=1 // pred_fallthru
      _
    // Predicated region
    $region38: #{tpu_custom_call.1} parent=1 // pred_check
      _
    $region39: #{tpu_custom_call.1} parent=1 // pred_check_branch
      %85 = sbr.rel (0) target = $region41
    $region40: #{tpu_custom_call.1} parent=1 // pred_region
      %86 = dma.done [#allocation9], 128
    $region41: #{tpu_custom_call.1} parent=1 // pred_fallthru
      _
    %v87 = vld [vmem:[#allocation10] sm:$0xff]
    %v88 = vlaneseq
    %v89 = vshrl.u32 %v88, 7
    %v90 = vadd.s32 %v89, 8
    %vm91 = vcmp.ne.s32.totalorder %v89, 0
    %vm92 = vcmp.ne.s32.totalorder %v90, 0
    %vm93 = vcmp.ne.s32.totalorder %v89, 15
    %vm94 = vcmp.ne.s32.totalorder %v90, 15
    %v95 = vld [vmem:[#allocation2] sm:$0xff]
    %v96 = vld [vmem:[#allocation2 + $0x8] sm:$0xff]
    %v97 = vld [vmem:[#allocation2 + $0x10] sm:$0xff]
    %v98 = vld [vmem:[#allocation2 + $0x18] sm:$0xff]
    %v99 = vld [vmem:[#allocation5] sm:$0xff]
    %v100 = vld [vmem:[#allocation5 + $0x8] sm:$0xff]
    %v101 = vld [vmem:[#allocation5 + $0x10] sm:$0xff]
    %v102 = vld [vmem:[#allocation5 + $0x18] sm:$0xff]
    %v103 = vld [vmem:[#allocation5 + $0x20] sm:$0xff]
    %v104 = vld [vmem:[#allocation5 + $0x28] sm:$0xff]
    %v105 = vld [vmem:[#allocation5 + $0x30] sm:$0xff]
    %v106 = vld [vmem:[#allocation5 + $0x38] sm:$0xff]
    %v107 = vld [vmem:[#allocation5 + $0x40] sm:$0xff]
    %v108 = vld [vmem:[#allocation5 + $0x48] sm:$0xff]
    %v109 = vld [vmem:[#allocation5 + $0x50] sm:$0xff]
    %v110 = vld [vmem:[#allocation5 + $0x58] sm:$0xff]
    %v111 = vld [vmem:[#allocation5 + $0x60] sm:$0xff]
    %v112 = vld [vmem:[#allocation5 + $0x68] sm:$0xff]
    %v113 = vld [vmem:[#allocation5 + $0x70] sm:$0xff]
    %v114 = vld [vmem:[#allocation5 + $0x78] sm:$0xff]
    %vm115 = vcmask 523264
    %v117 = vsel %vm115, %v95, 0
    %v120 = vsel %vm115, %v96, 0
    %v123 = vsel %vm115, %v97, 0
    %v126 = vsel %vm115, %v98, 0
    %128 = vmatprep.subr.mxu0 0.0
    %129 = vmatpush1.msra.mxu0 0.0
    %130 = vmatprep.subr.mxu0 0.0
    %131 = vmatpush1.msra.mxu0 0.0
    %132 = vmatprep.subr.mxu0 0.0
    %133 = vmatpush1.msra.mxu0 0.0
    %134 = vmatprep.subr.mxu0 0.0
    %135 = vmatpush1.msra.mxu0 0.0
    %136 = vmatprep.subr.mxu0 0.0
    %137 = vmatpush1.msra.mxu0 0.0
    %138 = vmatprep.subr.mxu0 0.0
    %139 = vmatpush1.msra.mxu0 0.0
    %140 = vmatprep.subr.mxu0 0.0
    %141 = vmatpush1.msra.mxu0 0.0
    %142 = vmatprep.subr.mxu0 0.0
    %143 = vmatpush1.msra.mxu0 0.0
    %144 = vmatprep.subr.mxu0 %v114
    %145 = vmatpush1.msra.mxu0 %v113
    %146 = vmatprep.subr.mxu0 %v112
    %147 = vmatpush1.msra.mxu0 %v111
    %148 = vmatprep.subr.mxu0 %v110
    %149 = vmatpush1.msra.mxu0 %v109
    %150 = vmatprep.subr.mxu0 %v108
    %151 = vmatpush1.msra.mxu0 %v107
    %152 = vmatprep.subr.mxu0 %v106
    %153 = vmatpush1.msra.mxu0 %v105
    %154 = vmatprep.subr.mxu0 %v104
    %155 = vmatpush1.msra.mxu0 %v103
    %156 = vmatprep.subr.mxu0 %v102
    %157 = vmatpush1.msra.mxu0 %v101
    %158 = vmatprep.subr.mxu0 %v100
    %159 = vmatpush1.msra.mxu0 %v99
    %160 = vmatprep.subr.mxu0 0.0
    %161 = vmatpush2.msra.mxu0 0.0
    %162 = vmatprep.subr.mxu0 0.0
    %163 = vmatpush2.msra.mxu0 0.0
    %164 = vmatprep.subr.mxu0 0.0
    %165 = vmatpush2.msra.mxu0 0.0
    %166 = vmatprep.subr.mxu0 0.0
    %167 = vmatpush2.msra.mxu0 0.0
    %168 = vmatprep.subr.mxu0 0.0
    %169 = vmatpush2.msra.mxu0 0.0
    %170 = vmatprep.subr.mxu0 0.0
    %171 = vmatpush2.msra.mxu0 0.0
    %172 = vmatprep.subr.mxu0 0.0
    %173 = vmatpush2.msra.mxu0 0.0
    %174 = vmatprep.subr.mxu0 0.0
    %175 = vmatpush2.msra.mxu0 0.0
    %176 = vmatprep.subr.mxu0 0.0
    %177 = vmatpush2.msra.mxu0 0.0
    %178 = vmatprep.subr.mxu0 0.0
    %179 = vmatpush2.msra.mxu0 0.0
    %180 = vmatprep.subr.mxu0 0.0
    %181 = vmatpush2.msra.mxu0 0.0
    %182 = vmatprep.subr.mxu0 0.0
    %183 = vmatpush2.msra.mxu0 0.0
    %184 = vmatprep.subr.mxu0 0.0
    %185 = vmatpush2.msra.mxu0 0.0
    %186 = vmatprep.subr.mxu0 0.0
    %187 = vmatpush2.msra.mxu0 0.0
    %188 = vmatprep.subr.mxu0 0.0
    %189 = vmatpush2.msra.mxu0 0.0
    %190 = vmatprep.subr.mxu0 0.0
    %191 = vmatpush2.msra.mxu0 0.0
    %192 = vmatprep.mubr.f32.mxu0 0.0
    %193 = vmatmul.mubr.f32.gmra.mxu0 %v117
    %v194 = vpop.f32.mrf.mxu0
    %v195 = vadd.f32 0.0, %v194
    %v196 = vpop.f32.mrf.mxu0
    %v197 = vadd.f32 0.0, %v196
    %198 = vmatprep.mubr.f32.mxu0 0.0
    %199 = vmatmul.mubr.f32.gmra.mxu0 %v120
    %v200 = vpop.f32.mrf.mxu0
    %v201 = vadd.f32 0.0, %v200
    %v202 = vpop.f32.mrf.mxu0
    %v203 = vadd.f32 0.0, %v202
    %204 = vmatprep.mubr.f32.mxu0 0.0
    %205 = vmatmul.mubr.f32.gmra.mxu0 %v123
    %v206 = vpop.f32.mrf.mxu0
    %v207 = vadd.f32 0.0, %v206
    %v208 = vpop.f32.mrf.mxu0
    %v209 = vadd.f32 0.0, %v208
    %210 = vmatprep.mubr.f32.mxu0 0.0
    %211 = vmatmul.mubr.f32.gmra.mxu0 %v126
    %v212 = vpop.f32.mrf.mxu0
    %v213 = vadd.f32 0.0, %v212
    %v214 = vpop.f32.mrf.mxu0
    %v215 = vadd.f32 0.0, %v214
    %216 = vdwg.mxu0
    %v217 = vadd.f32 %v195, %v201
    %v218 = vadd.f32 %v217, %v207
    %v219 = vadd.f32 %v218, %v213
    %v220 = vrot.slane %v219, 4
    %v221 = vadd.f32 %v219, %v220
    %v222 = vrot.slane %v221, 2
    %v223 = vadd.f32 %v221, %v222
    %v224 = vrot.slane %v223, 1
    %v225 = vadd.f32 %v223, %v224
    %v226 = vmul.f32 %v195, %v195
    %v227 = vmul.f32 %v201, %v201
    %v228 = vmul.f32 %v207, %v207
    %v229 = vmul.f32 %v213, %v213
    %v230 = vadd.f32 %v226, %v227
    %v231 = vadd.f32 %v230, %v228
    %v232 = vadd.f32 %v231, %v229
    %v233 = vrot.slane %v232, 4
    %v234 = vadd.f32 %v232, %v233
    %v235 = vrot.slane %v234, 2
    %v236 = vadd.f32 %v234, %v235
    %v237 = vrot.slane %v236, 1
    %v238 = vadd.f32 %v236, %v237
    %239 = vrot.lane.b32.xlu0 %v225, 8
    %v240 = vpop.permute.xlu0 %239
    %v241 = vadd.f32 %v225, %v240
    %242 = vrot.lane.b32.xlu0 %v238, 8
    %v243 = vpop.permute.xlu0 %242
    %v244 = vadd.f32 %v238, %v243
    %245 = vrot.lane.b32.xlu0 %v241, 16
    %v246 = vpop.permute.xlu0 %245
    %v247 = vadd.f32 %v241, %v246
    %248 = vrot.lane.b32.xlu0 %v244, 16
    %v249 = vpop.permute.xlu0 %248
    %v250 = vadd.f32 %v244, %v249
    %251 = vrot.lane.b32.xlu0 %v247, 32
    %v252 = vpop.permute.xlu0 %251
    %v253 = vadd.f32 %v247, %v252
    %254 = vrot.lane.b32.xlu0 %v250, 32
    %v255 = vpop.permute.xlu0 %254
    %v256 = vadd.f32 %v250, %v255
    %257 = vrot.lane.b32.xlu0 %v253, 64
    %v258 = vpop.permute.xlu0 %257
    %v259 = vadd.f32 %v253, %v258
    %260 = vrot.lane.b32.xlu0 %v256, 64
    %v261 = vpop.permute.xlu0 %260
    %v262 = vadd.f32 %v256, %v261
    %v263 = vmul.f32 %v259, 0.001953125
    %v264 = vmul.f32 %v262, 0.001953125
    %v265 = vmul.f32 %v263, %v263
    %v266 = vsub.f32 %v264, %v265
    %v267 = vmax.f32 %v266, 0.0
    %v268 = vadd.f32 %v267, 1e-05
    %v269 = vrsqrt.pop %v268
    %v270 = vmul.f32 %v87, %v269
    %v271 = vlaneseq
    %v272 = vshrl.u32 %v271, 7
    %v273 = vsub.s32 0, %v272
    %v274 = vrot.slane %v270, %v273
    %v275 = vmul.f32 %v195, %v274
    %v276 = vmul.f32 %v201, %v274
    %v277 = vmul.f32 %v207, %v274
    %v278 = vmul.f32 %v213, %v274
    %v279 = vmul.f32 %v263, %v270
    %v281 = vrot.slane %v279, 7
    %v283 = vsub.f32 %v87, %v281
    %v284 = vlaneseq
    %v285 = vshrl.u32 %v284, 7
    %v286 = vsub.s32 1, %v285
    %v287 = vrot.slane %v283, %v286
    %v288 = vadd.f32 %v275, %v287
    %v289 = vadd.f32 %v276, %v287
    %v290 = vadd.f32 %v277, %v287
    %v291 = vadd.f32 %v278, %v287
    %vm292 = vcmp.gt.f32.partialorder %v288, 0.0
    %vm293 = vcmp.gt.f32.partialorder %v289, 0.0
    %vm294 = vcmp.gt.f32.partialorder %v290, 0.0
    %vm295 = vcmp.gt.f32.partialorder %v291, 0.0
    %v296 = vmin.f32 %v288, 0.0
    %v297 = vmin.f32 %v289, 0.0
    %v298 = vmin.f32 %v290, 0.0
    %v299 = vmin.f32 %v291, 0.0
    %v300 = vmul.f32 %v296, 1.442695
    %v301 = vpow.pop %v300
    %v302 = vmul.f32 %v297, 1.442695
    %v303 = vpow.pop %v302
    %v304 = vmul.f32 %v298, 1.442695
    %v305 = vpow.pop %v304
    %v306 = vmul.f32 %v299, 1.442695
    %v307 = vpow.pop %v306
    %v308 = vsub.f32 %v301, 1.0
    %v309 = vsub.f32 %v303, 1.0
    %v310 = vsub.f32 %v305, 1.0
    %v311 = vsub.f32 %v307, 1.0
    %v312 = vsel %vm292, %v288, %v308
    %v313 = vsel %vm293, %v289, %v309
    %v314 = vsel %vm294, %v290, %v310
    %v315 = vsel %vm295, %v291, %v311
    %v316 = vadd.f32 %v197, %v203
    %v317 = vadd.f32 %v316, %v209
    %v318 = vadd.f32 %v317, %v215
    %v319 = vrot.slane %v318, 4
    %v320 = vadd.f32 %v318, %v319
    %v321 = vrot.slane %v320, 2
    %v322 = vadd.f32 %v320, %v321
    %v323 = vrot.slane %v322, 1
    %v324 = vadd.f32 %v322, %v323
    %v325 = vmul.f32 %v197, %v197
    %v326 = vmul.f32 %v203, %v203
    %v327 = vmul.f32 %v209, %v209
    %v328 = vmul.f32 %v215, %v215
    %v329 = vadd.f32 %v325, %v326
    %v330 = vadd.f32 %v329, %v327
    %v331 = vadd.f32 %v330, %v328
    %v332 = vrot.slane %v331, 4
    %v333 = vadd.f32 %v331, %v332
    %v334 = vrot.slane %v333, 2
    %v335 = vadd.f32 %v333, %v334
    %v336 = vrot.slane %v335, 1
    %v337 = vadd.f32 %v335, %v336
    %338 = vrot.lane.b32.xlu0 %v324, 8
    %v339 = vpop.permute.xlu0 %338
    %v340 = vadd.f32 %v324, %v339
    %341 = vrot.lane.b32.xlu0 %v337, 8
    %v342 = vpop.permute.xlu0 %341
    %v343 = vadd.f32 %v337, %v342
    %344 = vrot.lane.b32.xlu0 %v340, 16
    %v345 = vpop.permute.xlu0 %344
    %v346 = vadd.f32 %v340, %v345
    %347 = vrot.lane.b32.xlu0 %v343, 16
    %v348 = vpop.permute.xlu0 %347
    %v349 = vadd.f32 %v343, %v348
    %350 = vrot.lane.b32.xlu0 %v346, 32
    %v351 = vpop.permute.xlu0 %350
    %v352 = vadd.f32 %v346, %v351
    %353 = vrot.lane.b32.xlu0 %v349, 32
    %v354 = vpop.permute.xlu0 %353
    %v355 = vadd.f32 %v349, %v354
    %356 = vrot.lane.b32.xlu0 %v352, 64
    %v357 = vpop.permute.xlu0 %356
    %v358 = vadd.f32 %v352, %v357
    %359 = vrot.lane.b32.xlu0 %v355, 64
    %v360 = vpop.permute.xlu0 %359
    %v361 = vadd.f32 %v355, %v360
    %v362 = vmul.f32 %v358, 0.001953125
    %v363 = vmul.f32 %v361, 0.001953125
    %v364 = vmul.f32 %v362, %v362
    %v365 = vsub.f32 %v363, %v364
    %v366 = vmax.f32 %v365, 0.0
    %v367 = vadd.f32 %v366, 1e-05
    %v368 = vrsqrt.pop %v367
    %v370 = vrot.slane %v368, 2
    %v372 = vmul.f32 %v87, %v370
    %v373 = vlaneseq
    %v374 = vshrl.u32 %v373, 7
    %v375 = vsub.s32 6, %v374
    %v376 = vrot.slane %v372, %v375
    %v377 = vmul.f32 %v197, %v376
    %v378 = vmul.f32 %v203, %v376
    %v379 = vmul.f32 %v209, %v376
    %v380 = vmul.f32 %v215, %v376
    %v382 = vrot.slane %v372, 6
    %v384 = vmul.f32 %v362, %v382
    %v386 = vrot.slane %v384, 1
    %v388 = vsub.f32 %v87, %v386
    %v389 = vlaneseq
    %v390 = vshrl.u32 %v389, 7
    %v391 = vsub.s32 7, %v390
    %v392 = vrot.slane %v388, %v391
    %v393 = vadd.f32 %v377, %v392
    %v394 = vadd.f32 %v378, %v392
    %v395 = vadd.f32 %v379, %v392
    %v396 = vadd.f32 %v380, %v392
    %vm397 = vcmp.gt.f32.partialorder %v393, 0.0
    %vm398 = vcmp.gt.f32.partialorder %v394, 0.0
    %vm399 = vcmp.gt.f32.partialorder %v395, 0.0
    %vm400 = vcmp.gt.f32.partialorder %v396, 0.0
    %v401 = vmin.f32 %v393, 0.0
    %v402 = vmin.f32 %v394, 0.0
    %v403 = vmin.f32 %v395, 0.0
    %v404 = vmin.f32 %v396, 0.0
    %v405 = vmul.f32 %v401, 1.442695
    %v406 = vpow.pop %v405
    %v407 = vmul.f32 %v402, 1.442695
    %v408 = vpow.pop %v407
    %v409 = vmul.f32 %v403, 1.442695
    %v410 = vpow.pop %v409
    %v411 = vmul.f32 %v404, 1.442695
    %v412 = vpow.pop %v411
    %v413 = vsub.f32 %v406, 1.0
    %v414 = vsub.f32 %v408, 1.0
    %v415 = vsub.f32 %v410, 1.0
    %v416 = vsub.f32 %v412, 1.0
    %v417 = vsel %vm397, %v393, %v413
    %v418 = vsel %vm398, %v394, %v414
    %v419 = vsel %vm399, %v395, %v415
    %v420 = vsel %vm400, %v396, %v416
    %v421 = vrot.slane %v312, 7
    %v422 = vrot.slane %v313, 7
    %v423 = vrot.slane %v314, 7
    %v424 = vrot.slane %v315, 7
    %vm425 = vcmp.lt.s32.totalorder %v89, 1
    %v426 = vsel %vm425, %v423, %v424
    %v427 = vsel %vm425, %v422, %v423
    %v428 = vsel %vm425, %v421, %v422
    %v429 = vsel %vm425, %v424, %v421
    %v430 = vsel %vm91, %v429, 0.0
    %v431 = vsel %vm92, %v428, 0.0
    %v432 = vsel %vm91, %v427, 0.0
    %v433 = vsel %vm92, %v426, 0.0
    %v434 = vrot.slane %v312, 1
    %v435 = vrot.slane %v313, 1
    %v436 = vrot.slane %v314, 1
    %v437 = vrot.slane %v315, 1
    %vm438 = vcmp.lt.s32.totalorder %v89, 7
    %v439 = vsel %vm438, %v436, %v437
    %v440 = vsel %vm438, %v435, %v436
    %v441 = vsel %vm438, %v434, %v435
    %v442 = vsel %vm438, %v437, %v434
    %v443 = vsel %vm93, %v441, 0.0
    %v444 = vsel %vm94, %v440, 0.0
    %v445 = vsel %vm93, %v439, 0.0
    %v446 = vsel %vm94, %v442, 0.0
    %v447 = vld [vmem:[#allocation7] sm:$0xff]
    %v448 = vld [vmem:[#allocation7 + $0x8] sm:$0xff]
    %v449 = vld [vmem:[#allocation7 + $0x10] sm:$0xff]
    %v450 = vld [vmem:[#allocation7 + $0x18] sm:$0xff]
    %v451 = vld [vmem:[#allocation7 + $0x20] sm:$0xff]
    %v452 = vld [vmem:[#allocation7 + $0x28] sm:$0xff]
    %v453 = vld [vmem:[#allocation7 + $0x30] sm:$0xff]
    %v454 = vld [vmem:[#allocation7 + $0x38] sm:$0xff]
    %v455 = vld [vmem:[#allocation7 + $0x40] sm:$0xff]
    %v456 = vld [vmem:[#allocation7 + $0x48] sm:$0xff]
    %v457 = vld [vmem:[#allocation7 + $0x50] sm:$0xff]
    %v458 = vld [vmem:[#allocation7 + $0x58] sm:$0xff]
    %v459 = vld [vmem:[#allocation7 + $0x60] sm:$0xff]
    %v460 = vld [vmem:[#allocation7 + $0x68] sm:$0xff]
    %v461 = vld [vmem:[#allocation7 + $0x70] sm:$0xff]
    %v462 = vld [vmem:[#allocation7 + $0x78] sm:$0xff]
    %v463 = vld [vmem:[#allocation7 + $0x80] sm:$0xff]
    %v464 = vld [vmem:[#allocation7 + $0x88] sm:$0xff]
    %v465 = vld [vmem:[#allocation7 + $0x90] sm:$0xff]
    %v466 = vld [vmem:[#allocation7 + $0x98] sm:$0xff]
    %v467 = vld [vmem:[#allocation7 + $0xa0] sm:$0xff]
    %v468 = vld [vmem:[#allocation7 + $0xa8] sm:$0xff]
    %v469 = vld [vmem:[#allocation7 + $0xb0] sm:$0xff]
    %v470 = vld [vmem:[#allocation7 + $0xb8] sm:$0xff]
    %v471 = vld [vmem:[#allocation7 + $0xc0] sm:$0xff]
    %v472 = vld [vmem:[#allocation7 + $0xc8] sm:$0xff]
    %v473 = vld [vmem:[#allocation7 + $0xd0] sm:$0xff]
    %v474 = vld [vmem:[#allocation7 + $0xd8] sm:$0xff]
    %v475 = vld [vmem:[#allocation7 + $0xe0] sm:$0xff]
    %v476 = vld [vmem:[#allocation7 + $0xe8] sm:$0xff]
    %v477 = vld [vmem:[#allocation7 + $0xf0] sm:$0xff]
    %v478 = vld [vmem:[#allocation7 + $0xf8] sm:$0xff]
    %v479 = vld [vmem:[#allocation7 + $0x100] sm:$0xff]
    %v480 = vld [vmem:[#allocation7 + $0x108] sm:$0xff]
    %v481 = vld [vmem:[#allocation7 + $0x110] sm:$0xff]
    %v482 = vld [vmem:[#allocation7 + $0x118] sm:$0xff]
    %v483 = vld [vmem:[#allocation7 + $0x120] sm:$0xff]
    %v484 = vld [vmem:[#allocation7 + $0x128] sm:$0xff]
    %v485 = vld [vmem:[#allocation7 + $0x130] sm:$0xff]
    %v486 = vld [vmem:[#allocation7 + $0x138] sm:$0xff]
    %v487 = vld [vmem:[#allocation7 + $0x140] sm:$0xff]
    %v488 = vld [vmem:[#allocation7 + $0x148] sm:$0xff]
    %v489 = vld [vmem:[#allocation7 + $0x150] sm:$0xff]
    %v490 = vld [vmem:[#allocation7 + $0x158] sm:$0xff]
    %v491 = vld [vmem:[#allocation7 + $0x160] sm:$0xff]
    %v492 = vld [vmem:[#allocation7 + $0x168] sm:$0xff]
    %v493 = vld [vmem:[#allocation7 + $0x170] sm:$0xff]
    %v494 = vld [vmem:[#allocation7 + $0x178] sm:$0xff]
    %495 = vmatprep.subr.mxu0 0.0
    %496 = vmatpush1.msra.mxu0 %v462
    %497 = vmatprep.subr.mxu0 0.0
    %498 = vmatpush1.msra.mxu0 %v461
    %499 = vmatprep.subr.mxu0 0.0
    %500 = vmatpush1.msra.mxu0 %v460
    %501 = vmatprep.subr.mxu0 0.0
    %502 = vmatpush1.msra.mxu0 %v459
    %503 = vmatprep.subr.mxu0 0.0
    %504 = vmatpush1.msra.mxu0 %v458
    %505 = vmatprep.subr.mxu0 0.0
    %506 = vmatpush1.msra.mxu0 %v457
    %507 = vmatprep.subr.mxu0 0.0
    %508 = vmatpush1.msra.mxu0 %v456
    %509 = vmatprep.subr.mxu0 0.0
    %510 = vmatpush1.msra.mxu0 %v455
    %511 = vmatprep.subr.mxu0 0.0
    %512 = vmatpush1.msra.mxu0 %v454
    %513 = vmatprep.subr.mxu0 0.0
    %514 = vmatpush1.msra.mxu0 %v453
    %515 = vmatprep.subr.mxu0 0.0
    %516 = vmatpush1.msra.mxu0 %v452
    %517 = vmatprep.subr.mxu0 0.0
    %518 = vmatpush1.msra.mxu0 %v451
    %519 = vmatprep.subr.mxu0 0.0
    %520 = vmatpush1.msra.mxu0 %v450
    %521 = vmatprep.subr.mxu0 0.0
    %522 = vmatpush1.msra.mxu0 %v449
    %523 = vmatprep.subr.mxu0 0.0
    %524 = vmatpush1.msra.mxu0 %v448
    %525 = vmatprep.subr.mxu0 0.0
    %526 = vmatpush1.msra.mxu0 %v447
    %527 = vmatprep.subr.mxu0 0.0
    %528 = vmatpush2.msra.mxu0 %v478
    %529 = vmatprep.subr.mxu0 0.0
    %530 = vmatpush2.msra.mxu0 %v477
    %531 = vmatprep.subr.mxu0 0.0
    %532 = vmatpush2.msra.mxu0 %v476
    %533 = vmatprep.subr.mxu0 0.0
    %534 = vmatpush2.msra.mxu0 %v475
    %535 = vmatprep.subr.mxu0 0.0
    %536 = vmatpush2.msra.mxu0 %v474
    %537 = vmatprep.subr.mxu0 0.0
    %538 = vmatpush2.msra.mxu0 %v473
    %539 = vmatprep.subr.mxu0 0.0
    %540 = vmatpush2.msra.mxu0 %v472
    %541 = vmatprep.subr.mxu0 0.0
    %542 = vmatpush2.msra.mxu0 %v471
    %543 = vmatprep.subr.mxu0 0.0
    %544 = vmatpush2.msra.mxu0 %v470
    %545 = vmatprep.subr.mxu0 0.0
    %546 = vmatpush2.msra.mxu0 %v469
    %547 = vmatprep.subr.mxu0 0.0
    %548 = vmatpush2.msra.mxu0 %v468
    %549 = vmatprep.subr.mxu0 0.0
    %550 = vmatpush2.msra.mxu0 %v467
    %551 = vmatprep.subr.mxu0 0.0
    %552 = vmatpush2.msra.mxu0 %v466
    %553 = vmatprep.subr.mxu0 0.0
    %554 = vmatpush2.msra.mxu0 %v465
    %555 = vmatprep.subr.mxu0 0.0
    %556 = vmatpush2.msra.mxu0 %v464
    %557 = vmatprep.subr.mxu0 0.0
    %558 = vmatpush2.msra.mxu0 %v463
    %559 = vmatprep.mubr.f32.mxu0 %v312
    %560 = vmatmul.mubr.f32.gmra.mxu0 %v430
    %v561 = vpop.f32.mrf.mxu0
    %v562 = vadd.f32 0.0, %v561
    %v563 = vpop.f32.mrf.mxu0
    %564 = vmatprep.mubr.f32.mxu0 %v313
    %565 = vmatmul.mubr.f32.gmra.mxu0 %v431
    %v566 = vpop.f32.mrf.mxu0
    %v567 = vadd.f32 0.0, %v566
    %v568 = vpop.f32.mrf.mxu0
    %569 = vmatprep.mubr.f32.mxu0 %v314
    %570 = vmatmul.mubr.f32.gmra.mxu0 %v432
    %v571 = vpop.f32.mrf.mxu0
    %v572 = vadd.f32 0.0, %v571
    %v573 = vpop.f32.mrf.mxu0
    %574 = vmatprep.mubr.f32.mxu0 %v315
    %575 = vmatmul.mubr.f32.gmra.mxu0 %v433
    %v576 = vpop.f32.mrf.mxu0
    %v577 = vadd.f32 0.0, %v576
    %v578 = vpop.f32.mrf.mxu0
    %579 = vdwg.mxu0
    %580 = vmatprep.subr.mxu0 0.0
    %581 = vmatpush1.msra.mxu0 %v494
    %582 = vmatprep.subr.mxu0 0.0
    %583 = vmatpush1.msra.mxu0 %v493
    %584 = vmatprep.subr.mxu0 0.0
    %585 = vmatpush1.msra.mxu0 %v492
    %586 = vmatprep.subr.mxu0 0.0
    %587 = vmatpush1.msra.mxu0 %v491
    %588 = vmatprep.subr.mxu0 0.0
    %589 = vmatpush1.msra.mxu0 %v490
    %590 = vmatprep.subr.mxu0 0.0
    %591 = vmatpush1.msra.mxu0 %v489
    %592 = vmatprep.subr.mxu0 0.0
    %593 = vmatpush1.msra.mxu0 %v488
    %594 = vmatprep.subr.mxu0 0.0
    %595 = vmatpush1.msra.mxu0 %v487
    %596 = vmatprep.subr.mxu0 0.0
    %597 = vmatpush1.msra.mxu0 %v486
    %598 = vmatprep.subr.mxu0 0.0
    %599 = vmatpush1.msra.mxu0 %v485
    %600 = vmatprep.subr.mxu0 0.0
    %601 = vmatpush1.msra.mxu0 %v484
    %602 = vmatprep.subr.mxu0 0.0
    %603 = vmatpush1.msra.mxu0 %v483
    %604 = vmatprep.subr.mxu0 0.0
    %605 = vmatpush1.msra.mxu0 %v482
    %606 = vmatprep.subr.mxu0 0.0
    %607 = vmatpush1.msra.mxu0 %v481
    %608 = vmatprep.subr.mxu0 0.0
    %609 = vmatpush1.msra.mxu0 %v480
    %610 = vmatprep.subr.mxu0 0.0
    %611 = vmatpush1.msra.mxu0 %v479
    %612 = vmatprep.subr.mxu0 0.0
    %613 = vmatpush2.msra.mxu0 0.0
    %614 = vmatprep.subr.mxu0 0.0
    %615 = vmatpush2.msra.mxu0 0.0
    %616 = vmatprep.subr.mxu0 0.0
    %617 = vmatpush2.msra.mxu0 0.0
    %618 = vmatprep.subr.mxu0 0.0
    %619 = vmatpush2.msra.mxu0 0.0
    %620 = vmatprep.subr.mxu0 0.0
    %621 = vmatpush2.msra.mxu0 0.0
    %622 = vmatprep.subr.mxu0 0.0
    %623 = vmatpush2.msra.mxu0 0.0
    %624 = vmatprep.subr.mxu0 0.0
    %625 = vmatpush2.msra.mxu0 0.0
    %626 = vmatprep.subr.mxu0 0.0
    %627 = vmatpush2.msra.mxu0 0.0
    %628 = vmatprep.subr.mxu0 0.0
    %629 = vmatpush2.msra.mxu0 0.0
    %630 = vmatprep.subr.mxu0 0.0
    %631 = vmatpush2.msra.mxu0 0.0
    %632 = vmatprep.subr.mxu0 0.0
    %633 = vmatpush2.msra.mxu0 0.0
    %634 = vmatprep.subr.mxu0 0.0
    %635 = vmatpush2.msra.mxu0 0.0
    %636 = vmatprep.subr.mxu0 0.0
    %637 = vmatpush2.msra.mxu0 0.0
    %638 = vmatprep.subr.mxu0 0.0
    %639 = vmatpush2.msra.mxu0 0.0
    %640 = vmatprep.subr.mxu0 0.0
    %641 = vmatpush2.msra.mxu0 0.0
    %642 = vmatprep.subr.mxu0 0.0
    %643 = vmatpush2.msra.mxu0 0.0
    %644 = vmatprep.mubr.f32.mxu0 0.0
    %645 = vmatmul.mubr.f32.gmra.mxu0 %v443
    %v646 = vpop.f32.mrf.mxu0
    %v647 = vadd.f32 %v562, %v646
    %v648 = vpop.f32.mrf.mxu0
    %649 = vmatprep.mubr.f32.mxu0 0.0
    %650 = vmatmul.mubr.f32.gmra.mxu0 %v444
    %v651 = vpop.f32.mrf.mxu0
    %v652 = vadd.f32 %v567, %v651
    %v653 = vpop.f32.mrf.mxu0
    %654 = vmatprep.mubr.f32.mxu0 0.0
    %655 = vmatmul.mubr.f32.gmra.mxu0 %v445
    %v656 = vpop.f32.mrf.mxu0
    %v657 = vadd.f32 %v572, %v656
    %v658 = vpop.f32.mrf.mxu0
    %659 = vmatprep.mubr.f32.mxu0 0.0
    %660 = vmatmul.mubr.f32.gmra.mxu0 %v446
    %v661 = vpop.f32.mrf.mxu0
    %v662 = vadd.f32 %v577, %v661
    %v663 = vpop.f32.mrf.mxu0
    %664 = vdwg.mxu0
    %v665 = vadd.f32 %v647, %v652
    %v666 = vadd.f32 %v665, %v657
    %v667 = vadd.f32 %v666, %v662
    %v668 = vrot.slane %v667, 4
    %v669 = vadd.f32 %v667, %v668
    %v670 = vrot.slane %v669, 2
    %v671 = vadd.f32 %v669, %v670
    %v672 = vrot.slane %v671, 1
    %v673 = vadd.f32 %v671, %v672
    %v674 = vmul.f32 %v647, %v647
    %v675 = vmul.f32 %v652, %v652
    %v676 = vmul.f32 %v657, %v657
    %v677 = vmul.f32 %v662, %v662
    %v678 = vadd.f32 %v674, %v675
    %v679 = vadd.f32 %v678, %v676
    %v680 = vadd.f32 %v679, %v677
    %v681 = vrot.slane %v680, 4
    %v682 = vadd.f32 %v680, %v681
    %v683 = vrot.slane %v682, 2
    %v684 = vadd.f32 %v682, %v683
    %v685 = vrot.slane %v684, 1
    %v686 = vadd.f32 %v684, %v685
    %687 = vrot.lane.b32.xlu0 %v673, 8
    %v688 = vpop.permute.xlu0 %687
    %v689 = vadd.f32 %v673, %v688
    %690 = vrot.lane.b32.xlu0 %v686, 8
    %v691 = vpop.permute.xlu0 %690
    %v692 = vadd.f32 %v686, %v691
    %693 = vrot.lane.b32.xlu0 %v689, 16
    %v694 = vpop.permute.xlu0 %693
    %v695 = vadd.f32 %v689, %v694
    %696 = vrot.lane.b32.xlu0 %v692, 16
    %v697 = vpop.permute.xlu0 %696
    %v698 = vadd.f32 %v692, %v697
    %699 = vrot.lane.b32.xlu0 %v695, 32
    %v700 = vpop.permute.xlu0 %699
    %v701 = vadd.f32 %v695, %v700
    %702 = vrot.lane.b32.xlu0 %v698, 32
    %v703 = vpop.permute.xlu0 %702
    %v704 = vadd.f32 %v698, %v703
    %705 = vrot.lane.b32.xlu0 %v701, 64
    %v706 = vpop.permute.xlu0 %705
    %v707 = vadd.f32 %v701, %v706
    %708 = vrot.lane.b32.xlu0 %v704, 64
    %v709 = vpop.permute.xlu0 %708
    %v710 = vadd.f32 %v704, %v709
    %v711 = vmul.f32 %v707, 0.001953125
    %v712 = vmul.f32 %v710, 0.001953125
    %v713 = vmul.f32 %v711, %v711
    %v714 = vsub.f32 %v712, %v713
    %v715 = vmax.f32 %v714, 0.0
    %v716 = vadd.f32 %v715, 1e-05
    %v717 = vrsqrt.pop %v716
    %v719 = vrot.slane %v717, 6
    %v721 = vmul.f32 %v87, %v719
    %v722 = vlaneseq
    %v723 = vshrl.u32 %v722, 7
    %v724 = vsub.s32 2, %v723
    %v725 = vrot.slane %v721, %v724
    %v726 = vmul.f32 %v647, %v725
    %v727 = vmul.f32 %v652, %v725
    %v728 = vmul.f32 %v657, %v725
    %v729 = vmul.f32 %v662, %v725
    %v731 = vrot.slane %v721, 2
    %v733 = vmul.f32 %v711, %v731
    %v735 = vrot.slane %v733, 5
    %v737 = vsub.f32 %v87, %v735
    %v738 = vlaneseq
    %v739 = vshrl.u32 %v738, 7
    %v740 = vsub.s32 3, %v739
    %v741 = vrot.slane %v737, %v740
    %v742 = vadd.f32 %v726, %v741
    %v743 = vadd.f32 %v727, %v741
    %v744 = vadd.f32 %v728, %v741
    %v745 = vadd.f32 %v729, %v741
    %vm746 = vcmp.gt.f32.partialorder %v742, 0.0
    %vm747 = vcmp.gt.f32.partialorder %v743, 0.0
    %vm748 = vcmp.gt.f32.partialorder %v744, 0.0
    %vm749 = vcmp.gt.f32.partialorder %v745, 0.0
    %v750 = vmin.f32 %v742, 0.0
    %v751 = vmin.f32 %v743, 0.0
    %v752 = vmin.f32 %v744, 0.0
    %v753 = vmin.f32 %v745, 0.0
    %v754 = vmul.f32 %v750, 1.442695
    %v755 = vpow.pop %v754
    %v756 = vmul.f32 %v751, 1.442695
    %v757 = vpow.pop %v756
    %v758 = vmul.f32 %v752, 1.442695
    %v759 = vpow.pop %v758
    %v760 = vmul.f32 %v753, 1.442695
    %v761 = vpow.pop %v760
    %v762 = vsub.f32 %v755, 1.0
    %v763 = vsub.f32 %v757, 1.0
    %v764 = vsub.f32 %v759, 1.0
    %v765 = vsub.f32 %v761, 1.0
    %v766 = vsel %vm746, %v742, %v762
    %v767 = vsel %vm747, %v743, %v763
    %v768 = vsel %vm748, %v744, %v764
    %v769 = vsel %vm749, %v745, %v765
    %v770 = vrot.slane %v766, 7
    %v771 = vrot.slane %v767, 7
    %v772 = vrot.slane %v768, 7
    %v773 = vrot.slane %v769, 7
    %v774 = vsel %vm425, %v772, %v773
    %v775 = vsel %vm425, %v771, %v772
    %v776 = vsel %vm425, %v770, %v771
    %v777 = vsel %vm425, %v773, %v770
    %v778 = vsel %vm91, %v777, 0.0
    %v779 = vsel %vm92, %v776, 0.0
    %v780 = vsel %vm91, %v775, 0.0
    %v781 = vsel %vm92, %v774, 0.0
    %v782 = vrot.slane %v766, 1
    %v783 = vrot.slane %v767, 1
    %v784 = vrot.slane %v768, 1
    %v785 = vrot.slane %v769, 1
    %v786 = vsel %vm438, %v784, %v785
    %v787 = vsel %vm438, %v783, %v784
    %v788 = vsel %vm438, %v782, %v783
    %v789 = vsel %vm438, %v785, %v782
    %v790 = vsel %vm93, %v788, 0.0
    %v791 = vsel %vm94, %v787, 0.0
    %v792 = vsel %vm93, %v786, 0.0
    %v793 = vsel %vm94, %v789, 0.0
    %v794 = vld [vmem:[#allocation8] sm:$0xff]
    %v795 = vld [vmem:[#allocation8 + $0x8] sm:$0xff]
    %v796 = vld [vmem:[#allocation8 + $0x10] sm:$0xff]
    %v797 = vld [vmem:[#allocation8 + $0x18] sm:$0xff]
    %v798 = vld [vmem:[#allocation8 + $0x20] sm:$0xff]
    %v799 = vld [vmem:[#allocation8 + $0x28] sm:$0xff]
    %v800 = vld [vmem:[#allocation8 + $0x30] sm:$0xff]
    %v801 = vld [vmem:[#allocation8 + $0x38] sm:$0xff]
    %v802 = vld [vmem:[#allocation8 + $0x40] sm:$0xff]
    %v803 = vld [vmem:[#allocation8 + $0x48] sm:$0xff]
    %v804 = vld [vmem:[#allocation8 + $0x50] sm:$0xff]
    %v805 = vld [vmem:[#allocation8 + $0x58] sm:$0xff]
    %v806 = vld [vmem:[#allocation8 + $0x60] sm:$0xff]
    %v807 = vld [vmem:[#allocation8 + $0x68] sm:$0xff]
    %v808 = vld [vmem:[#allocation8 + $0x70] sm:$0xff]
    %v809 = vld [vmem:[#allocation8 + $0x78] sm:$0xff]
    %v810 = vld [vmem:[#allocation8 + $0x80] sm:$0xff]
    %v811 = vld [vmem:[#allocation8 + $0x88] sm:$0xff]
    %v812 = vld [vmem:[#allocation8 + $0x90] sm:$0xff]
    %v813 = vld [vmem:[#allocation8 + $0x98] sm:$0xff]
    %v814 = vld [vmem:[#allocation8 + $0xa0] sm:$0xff]
    %v815 = vld [vmem:[#allocation8 + $0xa8] sm:$0xff]
    %v816 = vld [vmem:[#allocation8 + $0xb0] sm:$0xff]
    %v817 = vld [vmem:[#allocation8 + $0xb8] sm:$0xff]
    %v818 = vld [vmem:[#allocation8 + $0xc0] sm:$0xff]
    %v819 = vld [vmem:[#allocation8 + $0xc8] sm:$0xff]
    %v820 = vld [vmem:[#allocation8 + $0xd0] sm:$0xff]
    %v821 = vld [vmem:[#allocation8 + $0xd8] sm:$0xff]
    %v822 = vld [vmem:[#allocation8 + $0xe0] sm:$0xff]
    %v823 = vld [vmem:[#allocation8 + $0xe8] sm:$0xff]
    %v824 = vld [vmem:[#allocation8 + $0xf0] sm:$0xff]
    %v825 = vld [vmem:[#allocation8 + $0xf8] sm:$0xff]
    %v826 = vld [vmem:[#allocation8 + $0x100] sm:$0xff]
    %v827 = vld [vmem:[#allocation8 + $0x108] sm:$0xff]
    %v828 = vld [vmem:[#allocation8 + $0x110] sm:$0xff]
    %v829 = vld [vmem:[#allocation8 + $0x118] sm:$0xff]
    %v830 = vld [vmem:[#allocation8 + $0x120] sm:$0xff]
    %v831 = vld [vmem:[#allocation8 + $0x128] sm:$0xff]
    %v832 = vld [vmem:[#allocation8 + $0x130] sm:$0xff]
    %v833 = vld [vmem:[#allocation8 + $0x138] sm:$0xff]
    %v834 = vld [vmem:[#allocation8 + $0x140] sm:$0xff]
    %v835 = vld [vmem:[#allocation8 + $0x148] sm:$0xff]
    %v836 = vld [vmem:[#allocation8 + $0x150] sm:$0xff]
    %v837 = vld [vmem:[#allocation8 + $0x158] sm:$0xff]
    %v838 = vld [vmem:[#allocation8 + $0x160] sm:$0xff]
    %v839 = vld [vmem:[#allocation8 + $0x168] sm:$0xff]
    %v840 = vld [vmem:[#allocation8 + $0x170] sm:$0xff]
    %v841 = vld [vmem:[#allocation8 + $0x178] sm:$0xff]
    %842 = vmatprep.subr.mxu0 0.0
    %843 = vmatpush1.msra.mxu0 %v809
    %844 = vmatprep.subr.mxu0 0.0
    %845 = vmatpush1.msra.mxu0 %v808
    %846 = vmatprep.subr.mxu0 0.0
    %847 = vmatpush1.msra.mxu0 %v807
    %848 = vmatprep.subr.mxu0 0.0
    %849 = vmatpush1.msra.mxu0 %v806
    %850 = vmatprep.subr.mxu0 0.0
    %851 = vmatpush1.msra.mxu0 %v805
    %852 = vmatprep.subr.mxu0 0.0
    %853 = vmatpush1.msra.mxu0 %v804
    %854 = vmatprep.subr.mxu0 0.0
    %855 = vmatpush1.msra.mxu0 %v803
    %856 = vmatprep.subr.mxu0 0.0
    %857 = vmatpush1.msra.mxu0 %v802
    %858 = vmatprep.subr.mxu0 0.0
    %859 = vmatpush1.msra.mxu0 %v801
    %860 = vmatprep.subr.mxu0 0.0
    %861 = vmatpush1.msra.mxu0 %v800
    %862 = vmatprep.subr.mxu0 0.0
    %863 = vmatpush1.msra.mxu0 %v799
    %864 = vmatprep.subr.mxu0 0.0
    %865 = vmatpush1.msra.mxu0 %v798
    %866 = vmatprep.subr.mxu0 0.0
    %867 = vmatpush1.msra.mxu0 %v797
    %868 = vmatprep.subr.mxu0 0.0
    %869 = vmatpush1.msra.mxu0 %v796
    %870 = vmatprep.subr.mxu0 0.0
    %871 = vmatpush1.msra.mxu0 %v795
    %872 = vmatprep.subr.mxu0 0.0
    %873 = vmatpush1.msra.mxu0 %v794
    %874 = vmatprep.subr.mxu0 0.0
    %875 = vmatpush2.msra.mxu0 %v825
    %876 = vmatprep.subr.mxu0 0.0
    %877 = vmatpush2.msra.mxu0 %v824
    %878 = vmatprep.subr.mxu0 0.0
    %879 = vmatpush2.msra.mxu0 %v823
    %880 = vmatprep.subr.mxu0 0.0
    %881 = vmatpush2.msra.mxu0 %v822
    %882 = vmatprep.subr.mxu0 0.0
    %883 = vmatpush2.msra.mxu0 %v821
    %884 = vmatprep.subr.mxu0 0.0
    %885 = vmatpush2.msra.mxu0 %v820
    %886 = vmatprep.subr.mxu0 0.0
    %887 = vmatpush2.msra.mxu0 %v819
    %888 = vmatprep.subr.mxu0 0.0
    %889 = vmatpush2.msra.mxu0 %v818
    %890 = vmatprep.subr.mxu0 0.0
    %891 = vmatpush2.msra.mxu0 %v817
    %892 = vmatprep.subr.mxu0 0.0
    %893 = vmatpush2.msra.mxu0 %v816
    %894 = vmatprep.subr.mxu0 0.0
    %895 = vmatpush2.msra.mxu0 %v815
    %896 = vmatprep.subr.mxu0 0.0
    %897 = vmatpush2.msra.mxu0 %v814
    %898 = vmatprep.subr.mxu0 0.0
    %899 = vmatpush2.msra.mxu0 %v813
    %900 = vmatprep.subr.mxu0 0.0
    %901 = vmatpush2.msra.mxu0 %v812
    %902 = vmatprep.subr.mxu0 0.0
    %903 = vmatpush2.msra.mxu0 %v811
    %904 = vmatprep.subr.mxu0 0.0
    %905 = vmatpush2.msra.mxu0 %v810
    %906 = vmatprep.mubr.f32.mxu0 %v766
    %907 = vmatmul.mubr.f32.gmra.mxu0 %v778
    %v908 = vpop.f32.mrf.mxu0
    %v909 = vadd.f32 0.0, %v908
    %v910 = vpop.f32.mrf.mxu0
    %911 = vmatprep.mubr.f32.mxu0 %v767
    %912 = vmatmul.mubr.f32.gmra.mxu0 %v779
    %v913 = vpop.f32.mrf.mxu0
    %v914 = vadd.f32 0.0, %v913
    %v915 = vpop.f32.mrf.mxu0
    %916 = vmatprep.mubr.f32.mxu0 %v768
    %917 = vmatmul.mubr.f32.gmra.mxu0 %v780
    %v918 = vpop.f32.mrf.mxu0
    %v919 = vadd.f32 0.0, %v918
    %v920 = vpop.f32.mrf.mxu0
    %921 = vmatprep.mubr.f32.mxu0 %v769
    %922 = vmatmul.mubr.f32.gmra.mxu0 %v781
    %v923 = vpop.f32.mrf.mxu0
    %v924 = vadd.f32 0.0, %v923
    %v925 = vpop.f32.mrf.mxu0
    %926 = vdwg.mxu0
    %927 = vmatprep.subr.mxu0 0.0
    %928 = vmatpush1.msra.mxu0 %v841
    %929 = vmatprep.subr.mxu0 0.0
    %930 = vmatpush1.msra.mxu0 %v840
    %931 = vmatprep.subr.mxu0 0.0
    %932 = vmatpush1.msra.mxu0 %v839
    %933 = vmatprep.subr.mxu0 0.0
    %934 = vmatpush1.msra.mxu0 %v838
    %935 = vmatprep.subr.mxu0 0.0
    %936 = vmatpush1.msra.mxu0 %v837
    %937 = vmatprep.subr.mxu0 0.0
    %938 = vmatpush1.msra.mxu0 %v836
    %939 = vmatprep.subr.mxu0 0.0
    %940 = vmatpush1.msra.mxu0 %v835
    %941 = vmatprep.subr.mxu0 0.0
    %942 = vmatpush1.msra.mxu0 %v834
    %943 = vmatprep.subr.mxu0 0.0
    %944 = vmatpush1.msra.mxu0 %v833
    %945 = vmatprep.subr.mxu0 0.0
    %946 = vmatpush1.msra.mxu0 %v832
    %947 = vmatprep.subr.mxu0 0.0
    %948 = vmatpush1.msra.mxu0 %v831
    %949 = vmatprep.subr.mxu0 0.0
    %950 = vmatpush1.msra.mxu0 %v830
    %951 = vmatprep.subr.mxu0 0.0
    %952 = vmatpush1.msra.mxu0 %v829
    %953 = vmatprep.subr.mxu0 0.0
    %954 = vmatpush1.msra.mxu0 %v828
    %955 = vmatprep.subr.mxu0 0.0
    %956 = vmatpush1.msra.mxu0 %v827
    %957 = vmatprep.subr.mxu0 0.0
    %958 = vmatpush1.msra.mxu0 %v826
    %959 = vmatprep.subr.mxu0 0.0
    %960 = vmatpush2.msra.mxu0 0.0
    %961 = vmatprep.subr.mxu0 0.0
    %962 = vmatpush2.msra.mxu0 0.0
    %963 = vmatprep.subr.mxu0 0.0
    %964 = vmatpush2.msra.mxu0 0.0
    %965 = vmatprep.subr.mxu0 0.0
    %966 = vmatpush2.msra.mxu0 0.0
    %967 = vmatprep.subr.mxu0 0.0
    %968 = vmatpush2.msra.mxu0 0.0
    %969 = vmatprep.subr.mxu0 0.0
    %970 = vmatpush2.msra.mxu0 0.0
    %971 = vmatprep.subr.mxu0 0.0
    %972 = vmatpush2.msra.mxu0 0.0
    %973 = vmatprep.subr.mxu0 0.0
    %974 = vmatpush2.msra.mxu0 0.0
    %975 = vmatprep.subr.mxu0 0.0
    %976 = vmatpush2.msra.mxu0 0.0
    %977 = vmatprep.subr.mxu0 0.0
    %978 = vmatpush2.msra.mxu0 0.0
    %979 = vmatprep.subr.mxu0 0.0
    %980 = vmatpush2.msra.mxu0 0.0
    %981 = vmatprep.subr.mxu0 0.0
    %982 = vmatpush2.msra.mxu0 0.0
    %983 = vmatprep.subr.mxu0 0.0
    %984 = vmatpush2.msra.mxu0 0.0
    %985 = vmatprep.subr.mxu0 0.0
    %986 = vmatpush2.msra.mxu0 0.0
    %987 = vmatprep.subr.mxu0 0.0
    %988 = vmatpush2.msra.mxu0 0.0
    %989 = vmatprep.subr.mxu0 0.0
    %990 = vmatpush2.msra.mxu0 0.0
    %991 = vmatprep.mubr.f32.mxu0 0.0
    %992 = vmatmul.mubr.f32.gmra.mxu0 %v790
    %v993 = vpop.f32.mrf.mxu0
    %v994 = vadd.f32 %v909, %v993
    %v995 = vpop.f32.mrf.mxu0
    %996 = vmatprep.mubr.f32.mxu0 0.0
    %997 = vmatmul.mubr.f32.gmra.mxu0 %v791
    %v998 = vpop.f32.mrf.mxu0
    %v999 = vadd.f32 %v914, %v998
    %v1000 = vpop.f32.mrf.mxu0
    %1001 = vmatprep.mubr.f32.mxu0 0.0
    %1002 = vmatmul.mubr.f32.gmra.mxu0 %v792
    %v1003 = vpop.f32.mrf.mxu0
    %v1004 = vadd.f32 %v919, %v1003
    %v1005 = vpop.f32.mrf.mxu0
    %1006 = vmatprep.mubr.f32.mxu0 0.0
    %1007 = vmatmul.mubr.f32.gmra.mxu0 %v793
    %v1008 = vpop.f32.mrf.mxu0
    %v1009 = vadd.f32 %v924, %v1008
    %v1010 = vpop.f32.mrf.mxu0
    %1011 = vdwg.mxu0
    %v1012 = vadd.f32 %v994, %v999
    %v1013 = vadd.f32 %v1012, %v1004
    %v1014 = vadd.f32 %v1013, %v1009
    %v1015 = vrot.slane %v1014, 4
    %v1016 = vadd.f32 %v1014, %v1015
    %v1017 = vrot.slane %v1016, 2
    %v1018 = vadd.f32 %v1016, %v1017
    %v1019 = vrot.slane %v1018, 1
    %v1020 = vadd.f32 %v1018, %v1019
    %v1021 = vmul.f32 %v994, %v994
    %v1022 = vmul.f32 %v999, %v999
    %v1023 = vmul.f32 %v1004, %v1004
    %v1024 = vmul.f32 %v1009, %v1009
    %v1025 = vadd.f32 %v1021, %v1022
    %v1026 = vadd.f32 %v1025, %v1023
    %v1027 = vadd.f32 %v1026, %v1024
    %v1028 = vrot.slane %v1027, 4
    %v1029 = vadd.f32 %v1027, %v1028
    %v1030 = vrot.slane %v1029, 2
    %v1031 = vadd.f32 %v1029, %v1030
    %v1032 = vrot.slane %v1031, 1
    %v1033 = vadd.f32 %v1031, %v1032
    %1034 = vrot.lane.b32.xlu0 %v1020, 8
    %v1035 = vpop.permute.xlu0 %1034
    %v1036 = vadd.f32 %v1020, %v1035
    %1037 = vrot.lane.b32.xlu0 %v1033, 8
    %v1038 = vpop.permute.xlu0 %1037
    %v1039 = vadd.f32 %v1033, %v1038
    %1040 = vrot.lane.b32.xlu0 %v1036, 16
    %v1041 = vpop.permute.xlu0 %1040
    %v1042 = vadd.f32 %v1036, %v1041
    %1043 = vrot.lane.b32.xlu0 %v1039, 16
    %v1044 = vpop.permute.xlu0 %1043
    %v1045 = vadd.f32 %v1039, %v1044
    %1046 = vrot.lane.b32.xlu0 %v1042, 32
    %v1047 = vpop.permute.xlu0 %1046
    %v1048 = vadd.f32 %v1042, %v1047
    %1049 = vrot.lane.b32.xlu0 %v1045, 32
    %v1050 = vpop.permute.xlu0 %1049
    %v1051 = vadd.f32 %v1045, %v1050
    %1052 = vrot.lane.b32.xlu0 %v1048, 64
    %v1053 = vpop.permute.xlu0 %1052
    %v1054 = vadd.f32 %v1048, %v1053
    %1055 = vrot.lane.b32.xlu0 %v1051, 64
    %v1056 = vpop.permute.xlu0 %1055
    %v1057 = vadd.f32 %v1051, %v1056
    %v1058 = vmul.f32 %v1054, 0.001953125
    %v1059 = vmul.f32 %v1057, 0.001953125
    %v1060 = vmul.f32 %v1058, %v1058
    %v1061 = vsub.f32 %v1059, %v1060
    %v1062 = vmax.f32 %v1061, 0.0
    %v1063 = vadd.f32 %v1062, 1e-05
    %v1064 = vrsqrt.pop %v1063
    %v1066 = vrot.slane %v1064, 4
    %v1068 = vmul.f32 %v87, %v1066
    %v1069 = vlaneseq
    %v1070 = vshrl.u32 %v1069, 7
    %v1071 = vsub.s32 4, %v1070
    %v1072 = vrot.slane %v1068, %v1071
    %v1073 = vmul.f32 %v994, %v1072
    %v1074 = vmul.f32 %v999, %v1072
    %v1075 = vmul.f32 %v1004, %v1072
    %v1076 = vmul.f32 %v1009, %v1072
    %v1078 = vrot.slane %v1068, 4
    %v1080 = vmul.f32 %v1058, %v1078
    %v1082 = vrot.slane %v1080, 3
    %v1084 = vsub.f32 %v87, %v1082
    %v1085 = vlaneseq
    %v1086 = vshrl.u32 %v1085, 7
    %v1087 = vsub.s32 5, %v1086
    %v1088 = vrot.slane %v1084, %v1087
    %v1089 = vadd.f32 %v1073, %v1088
    %v1090 = vadd.f32 %v1074, %v1088
    %v1091 = vadd.f32 %v1075, %v1088
    %v1092 = vadd.f32 %v1076, %v1088
    %v1093 = vadd.f32 %v1089, %v417
    %v1094 = vadd.f32 %v1090, %v418
    %v1095 = vadd.f32 %v1091, %v419
    %v1096 = vadd.f32 %v1092, %v420
    %vm1097 = vcmp.gt.f32.partialorder %v1093, 0.0
    %vm1098 = vcmp.gt.f32.partialorder %v1094, 0.0
    %vm1099 = vcmp.gt.f32.partialorder %v1095, 0.0
    %vm1100 = vcmp.gt.f32.partialorder %v1096, 0.0
    %v1101 = vmin.f32 %v1093, 0.0
    %v1102 = vmin.f32 %v1094, 0.0
    %v1103 = vmin.f32 %v1095, 0.0
    %v1104 = vmin.f32 %v1096, 0.0
    %v1105 = vmul.f32 %v1101, 1.442695
    %v1106 = vpow.pop %v1105
    %v1107 = vmul.f32 %v1102, 1.442695
    %v1108 = vpow.pop %v1107
    %v1109 = vmul.f32 %v1103, 1.442695
    %v1110 = vpow.pop %v1109
    %v1111 = vmul.f32 %v1104, 1.442695
    %v1112 = vpow.pop %v1111
    %v1113 = vsub.f32 %v1106, 1.0
    %v1114 = vsub.f32 %v1108, 1.0
    %v1115 = vsub.f32 %v1110, 1.0
    %v1116 = vsub.f32 %v1112, 1.0
    %v1117 = vsel %vm1097, %v1093, %v1113
    %v1118 = vsel %vm1098, %v1094, %v1114
    %v1119 = vsel %vm1099, %v1095, %v1115
    %v1120 = vsel %vm1100, %v1096, %v1116
    %1121 = vst [vmem:[#allocation11] sm:$0xff] %v1117
    %1122 = vst [vmem:[#allocation11 + $0x8] sm:$0xff] %v1118
    %1123 = vst [vmem:[#allocation11 + $0x10] sm:$0xff] %v1119
    %1124 = vst [vmem:[#allocation11 + $0x18] sm:$0xff] %v1120
    // Predicated region
    $region42: #{tpu_custom_call.1} parent=1 // pred_check
      _
    $region43: #{tpu_custom_call.1} parent=1 // pred_check_branch
      %1126 = sbr.rel (0) target = $region45
    $region44: #{tpu_custom_call.1} parent=1 // pred_region
      %s1128 = ssub.s32 512, 512
      %1129 = vsyncadd [#allocation4], %s1128
      %s1130 = sshll.u32 [#allocation11], 4
      %s1131 = int_to_ptr.vmem [resolvable:$true] %s1130
      %1136 = dma.vmem_to_hbm [thread:$0]  %s1131, 512, %s5, [#allocation4], 128, 128, 8
    $region45: #{tpu_custom_call.1} parent=1 // pred_fallthru
      _
    // Predicated region
    $region46: #{tpu_custom_call.1} parent=1 // pred_check
      _
    $region47: #{tpu_custom_call.1} parent=1 // pred_check_branch
      %1138 = sbr.rel (0) target = $region49
    $region48: #{tpu_custom_call.1} parent=1 // pred_region
      %1139 = dma.done [#allocation4], 512
    $region49: #{tpu_custom_call.1} parent=1 // pred_fallthru
      _
    %1140 = vsyncpa [#allocation3], 1
    %1141 = vsyncpa [#allocation6], 1
    %1142 = vsyncpa [#allocation9], 1
    %1143 = vsyncpa [#allocation4], 1

</llo_original>
